<compile_context>
chip_gen: v6e
topology: v6e:2x2x1
jax: 0.10.0
libtpu: 0.0.40
codegen_flags: <defaults>
</compile_context>

<pallas_src>
import functools

import jax
import jax.numpy as jnp
from jax.experimental import pallas as pl
from jax.experimental.pallas import tpu as pltpu


# ----------------------------- Pallas kernel --------------------------------
def egt_attn_kernel(q_ref, k_ref, v_ref, eg_ref, m_ref,
                    vatt_ref, hhat_ref, *,
                    num_heads, dot_dim, clip_min, clip_max):
    """One (batch element, query-row tile) step; all heads processed inside.

    q_ref:    (1,  tq, H*D)   bf16  (head-major channels, dot-scale pre-folded)
    k_ref:    (1,  N,  H*D)   bf16  (resident across the query tiles of a batch)
    v_ref:    (1,  N,  H*D)   bf16
    eg_ref:   (2H, 1, tq, N)  bf16  (E planes for heads 0..H-1, then G planes)
    m_ref:    (1,  tq, N)     bf16  additive mask (0 keep / -1e9 masked)
    vatt_ref: (1,  tq, H*D)   f32   output (lane-dense, single store)
    hhat_ref: (1,  H, tq, N)  bf16  output (per-head planes, no relayout)
    """
    q = q_ref[0]                               # (tq, H*D) bf16
    k = k_ref[0]                               # (N,  H*D) bf16
    v = v_ref[0]                               # (N,  H*D) bf16
    m = m_ref[0].astype(jnp.float32)           # (tq, N)   f32 (one upcast per tile)

    d = dot_dim
    v_parts = []
    for h in range(num_heads):                 # static unroll; num_heads is small
        q_h = q[:, h * d:(h + 1) * d]                      # (tq, D) bf16
        k_h = k[:, h * d:(h + 1) * d]                      # (N,  D) bf16
        v_h = v[:, h * d:(h + 1) * d]                      # (N,  D) bf16

        # A_hat[l, m] = sum_d Q[l, d] * K[m, d]   (bf16 MXU, f32 accumulate)
        a_hat = jax.lax.dot_general(
            q_h, k_h, (((1,), (1,)), ((), ())),
            preferred_element_type=jnp.float32)            # (tq, N) f32

        e_h = eg_ref[h, 0].astype(jnp.float32)             # (tq, N)
        h_hat = jnp.clip(a_hat, clip_min, clip_max) + e_h
        # store H_hat immediately to keep its live range short
        hhat_ref[0, h] = h_hat.astype(hhat_ref.dtype)

        g_h = eg_ref[num_heads + h, 0].astype(jnp.float32)
        logits = h_hat + m
        gates = jax.nn.sigmoid(g_h + m)

        # softmax over the key axis (last), denominator via EUP reciprocal
        lmax = jnp.max(logits, axis=-1, keepdims=True)
        p = jnp.exp(logits - lmax)
        denom = jnp.sum(p, axis=-1, keepdims=True)
        a_tild = (p * pl.reciprocal(denom, approx=True) * gates)

        # A_tild @ V on the MXU with bf16 operands, f32 accumulation
        v_parts.append(jnp.dot(a_tild.astype(jnp.bfloat16), v_h,
                               preferred_element_type=jnp.float32))  # (tq, D)

    # single lane-dense store of all heads' value outputs
    vatt_ref[0] = jnp.concatenate(v_parts, axis=-1)
    # TODO(synk): attn_dropout / attn_maskout / scale_degree (num_vns) paths of
    # the reference module are not implemented; the module defaults disable them.


# --------------------------- VMEM budgeting ----------------------------------
@functools.lru_cache(maxsize=None)
def _vmem_capacity_bytes():
    """Per-TensorCore VMEM capacity; conservative 64 MiB fallback (v7x-sized)."""
    try:
        info = pltpu.get_tpu_info()
        cap = int(getattr(info, "vmem_capacity_bytes", 0) or 0)
        if cap > 0:
            return cap
    except Exception:
        pass
    return 64 * 1024 * 1024


def _vmem_plan():
    cap = _vmem_capacity_bytes()
    # Leave headroom below physical for Mosaic-internal scratch / semaphores.
    vmem_limit = min(cap - 12 * 1024 * 1024, int(cap * 0.85))
    block_budget = vmem_limit - 4 * 1024 * 1024
    return block_budget, vmem_limit


def _auto_q_tile(n, num_heads, dot_dim, budget_bytes):
    """Largest query tile (multiple of 16, dividing N) whose double-buffered
    blocks plus estimated in-kernel f32 temporaries fit the VMEM budget."""
    hd = num_heads * dot_dim
    fixed = 2 * (2 * n * hd * 2)                      # K and V (bf16), double-buffered
    fallback = None
    for cand in (1024, 512, 256, 128, 64, 32, 16):    # multiples of 16 (bf16 tiles)
        if cand > n or n % cand:
            continue
        per = (cand * hd * 2                          # Q (bf16)
               + 2 * num_heads * cand * n * 2         # E||G (bf16)
               + cand * n * 2                         # mask (bf16)
               + cand * hd * 4                        # V_att out (f32)
               + num_heads * cand * n * 2)            # H_hat out (bf16)
        temps = 10 * cand * n * 4                     # Mosaic f32 (tq, N) temporaries
        if fixed + 2 * per + temps <= budget_bytes:
            return cand
        fallback = cand                               # ends as the smallest divisor
    return fallback if fallback is not None else n


# ----------------------------- kernel wrapper --------------------------------
def egt_attention(Q, K, V, EG, mask, *, num_heads, scale_dot,
                  clip_min, clip_max, q_tile=None):
    """Q/K/V: (B, N, H*D) (channels c = h*D + d), any float dtype;
       EG:    (2H, B, N, N) (E planes then G planes, head-outermost);
       mask:  (B, N, N) additive (0 keep / -1e9 masked).
    Returns (V_att (B, N, H*D) f32, H_hat (B, H, N, N) bf16)."""
    B, N, HD = Q.shape
    D = HD // num_heads
    assert EG.shape == (2 * num_heads, B, N, N)
    assert mask.shape == (B, N, N)

    # Fold the dot-product scale into Q (f32) before the bf16 cast, so the
    # kernel's MXU operands are pure bf16 and no per-head scaling is needed.
    if scale_dot:
        Q = Q.astype(jnp.float32) * (D ** -0.5)
    Qb = Q.astype(jnp.bfloat16)
    Kb = K.astype(jnp.bfloat16)
    Vb = V.astype(jnp.bfloat16)
    EGb = EG.astype(jnp.bfloat16)
    Mb = mask.astype(jnp.bfloat16)      # -1e9 rounds to ~-1e9; still fully masks

    block_budget, vmem_limit = _vmem_plan()
    if q_tile is None:
        q_tile = _auto_q_tile(N, num_heads, D, block_budget)
    if q_tile > N or N % q_tile:
        q_tile = N                                    # fall back to full rows
    T = N // q_tile

    kernel = functools.partial(
        egt_attn_kernel, num_heads=num_heads, dot_dim=D,
        clip_min=clip_min, clip_max=clip_max)

    in_specs = [
        pl.BlockSpec((1, q_tile, HD), lambda b, t: (b, t, 0)),                   # Q
        pl.BlockSpec((1, N, HD), lambda b, t: (b, 0, 0)),                        # K
        pl.BlockSpec((1, N, HD), lambda b, t: (b, 0, 0)),                        # V
        pl.BlockSpec((2 * num_heads, 1, q_tile, N), lambda b, t: (0, b, t, 0)),  # E||G
        pl.BlockSpec((1, q_tile, N), lambda b, t: (b, t, 0)),                    # mask
    ]
    out_specs = (
        pl.BlockSpec((1, q_tile, HD), lambda b, t: (b, t, 0)),                   # V_att
        pl.BlockSpec((1, num_heads, q_tile, N), lambda b, t: (b, 0, t, 0)),      # H_hat
    )
    out_shape = (
        jax.ShapeDtypeStruct((B, N, HD), jnp.float32),
        jax.ShapeDtypeStruct((B, num_heads, N, N), jnp.bfloat16),
    )
    # TODO(synk): single-buffering the K/V blocks (pl.Buffered(1)) would free
    # one resident copy each; skipped to keep the pipeline config conservative.
    return pl.pallas_call(
        kernel,
        grid=(B, T),
        in_specs=in_specs,
        out_specs=out_specs,
        out_shape=out_shape,
        compiler_params=pltpu.CompilerParams(
            # batch axis parallel (megacore split lands on B, preserving the
            # K/V residency across the query-tile axis on each core)
            dimension_semantics=("parallel", "arbitrary"),
            vmem_limit_bytes=int(vmem_limit)),
    )(Qb, Kb, Vb, EGb, Mb)


# Pure-JAX reference for the attention core (f32 Q/K/V, same bf16 E/G inputs).
def _attn_ref(Q, K, V, EG, mask, *, num_heads, scale_dot, clip_min, clip_max):
    B, N, HD = Q.shape
    D = HD // num_heads
    Qh = Q.reshape(B, N, num_heads, D)
    Kh = K.reshape(B, N, num_heads, D)
    Vh = V.reshape(B, N, num_heads, D)
    a_hat = jnp.einsum("blhd,bmhd->bhlm", Qh, Kh)
    if scale_dot:
        a_hat = a_hat * (D ** -0.5)
    E = jnp.transpose(EG[:num_heads].astype(jnp.float32), (1, 0, 2, 3))
    G = jnp.transpose(EG[num_heads:].astype(jnp.float32), (1, 0, 2, 3))
    h_hat = jnp.clip(a_hat, clip_min, clip_max) + E
    m = mask[:, None, :, :]
    gates = jax.nn.sigmoid(G + m)
    a_tild = jax.nn.softmax(h_hat + m, axis=-1) * gates
    v_att = jnp.einsum("bhlm,bmhd->blhd", a_tild, Vh).reshape(B, N, HD)
    return v_att, h_hat


# ----------------------------- JAX glue --------------------------------------
def layer_norm(x, gamma, beta, eps=1e-5):
    mu = jnp.mean(x, axis=-1, keepdims=True)
    var = jnp.mean((x - mu) ** 2, axis=-1, keepdims=True)
    return (x - mu) / jnp.sqrt(var + eps) * gamma + beta


def init_params(key, node_width, edge_width, num_heads,
                node_ffn_mult=2.0, edge_ffn_mult=2.0):
    node_inner = round(node_width * node_ffn_mult)
    edge_inner = round(edge_width * edge_ffn_mult)

    def lin(k, fan_in, fan_out):
        kw, kb = jax.random.split(k)
        w = 0.02 * jax.random.normal(kw, (fan_in, fan_out), jnp.float32)
        b = 0.01 * jax.random.normal(kb, (fan_out,), jnp.float32)
        return w, b

    keys = jax.random.split(key, 9)
    p = {}
    p["ln_h_g"] = jnp.ones((node_width,), jnp.float32)
    p["ln_h_b"] = jnp.zeros((node_width,), jnp.float32)
    p["ln_e_g"] = jnp.ones((edge_width,), jnp.float32)
    p["ln_e_b"] = jnp.zeros((edge_width,), jnp.float32)
    p["W_QKV"], p["b_QKV"] = lin(keys[0], node_width, node_width * 3)
    p["W_E"], p["b_E"] = lin(keys[1], edge_width, num_heads)
    p["W_G"], p["b_G"] = lin(keys[2], edge_width, num_heads)
    p["W_Oh"], p["b_Oh"] = lin(keys[3], node_width, node_width)
    p["ffn_ln_h_g"] = jnp.ones((node_width,), jnp.float32)
    p["ffn_ln_h_b"] = jnp.zeros((node_width,), jnp.float32)
    p["W_h1"], p["b_h1"] = lin(keys[4], node_width, node_inner)
    p["W_h2"], p["b_h2"] = lin(keys[5], node_inner, node_width)
    p["W_Oe"], p["b_Oe"] = lin(keys[6], num_heads, edge_width)
    p["ffn_ln_e_g"] = jnp.ones((edge_width,), jnp.float32)
    p["ffn_ln_e_b"] = jnp.zeros((edge_width,), jnp.float32)
    p["W_e1"], p["b_e1"] = lin(keys[7], edge_width, edge_inner)
    p["W_e2"], p["b_e2"] = lin(keys[8], edge_inner, edge_width)
    return p


def egt_layer_forward(h, e, mask, params, *, num_heads, scale_dot=True,
                      clip_logits_value=(-5.0, 5.0), use_pallas=True,
                      q_tile=None):
    B, N, node_width = h.shape
    D = node_width // num_heads
    p = params

    h_r1, e_r1 = h, e
    h_ln = layer_norm(h, p["ln_h_g"], p["ln_h_b"])
    e_ln = layer_norm(e, p["ln_e_g"], p["ln_e_b"])

    QKV = h_ln @ p["W_QKV"] + p["b_QKV"]              # (B, N, 3*node_width)
    # PyTorch: QKV.view(B, N, 3*dot_dim, H).split(dot_dim, dim=2)
    QKV_r = QKV.reshape(B, N, 3 * D, num_heads)

    def head_major(x):                                # (B, N, D, H) -> (B, N, H*D)
        return jnp.transpose(x, (0, 1, 3, 2)).reshape(B, N, num_heads * D)

    Q = head_major(QKV_r[:, :, 0 * D:1 * D])
    K = head_major(QKV_r[:, :, 1 * D:2 * D])
    V = head_major(QKV_r[:, :, 2 * D:3 * D])

    # Fused E/G projection straight into the head-outermost layout (2H, B, N, N)
    # -- the natural dot_general output order, so no (N, N)-plane transpose is
    # ever materialized.  bf16 halves the dominant HBM traffic.
    W_EG = jnp.concatenate([p["W_E"], p["W_G"]], axis=1)     # (edge_width, 2H)
    b_EG = jnp.concatenate([p["b_E"], p["b_G"]], axis=0)     # (2H,)
    EG = jnp.einsum("ch,blmc->hblm", W_EG, e_ln) + b_EG[:, None, None, None]
    EG = EG.astype(jnp.bfloat16)

    m2d = mask[..., 0]                                # (B, N, N) additive
    cmin, cmax = float(clip_logits_value[0]), float(clip_logits_value[1])

    if use_pallas:
        v_att, h_hat = egt_attention(
            Q, K, V, EG, m2d, num_heads=num_heads, scale_dot=scale_dot,
            clip_min=cmin, clip_max=cmax, q_tile=q_tile)
    else:
        v_att, h_hat = _attn_ref(
            Q, K, V, EG, m2d, num_heads=num_heads, scale_dot=scale_dot,
            clip_min=cmin, clip_max=cmax)

    # back to PyTorch's channel order c = d*H + h for the node output projection
    V_att = jnp.transpose(v_att.reshape(B, N, num_heads, D),
                          (0, 1, 3, 2)).reshape(B, N, node_width)

    # node MHA out + residual + FFN + residual
    h_new = V_att @ p["W_Oh"] + p["b_Oh"] + h_r1
    h_r2 = h_new
    h_ln2 = layer_norm(h_new, p["ffn_ln_h_g"], p["ffn_ln_h_b"])
    h_new = jax.nn.elu(h_ln2 @ p["W_h1"] + p["b_h1"]) @ p["W_h2"] + p["b_h2"] + h_r2

    # edge MHA out + residual + FFN + residual.  The W_Oe contraction runs over
    # the head axis of the head-major H_hat; the natural output order is already
    # (B, N, N, edge_width), so no (N, N)-plane transpose is materialized.  The
    # Pallas path consumes H_hat directly in bf16 (bf16 MXU, f32 output).
    # TODO(synk): on v5e this contraction + b_Oe + residual could be fused into
    # the kernel epilogue to eliminate the H_hat round trip entirely.
    if use_pallas:
        e_mha = jnp.einsum("bhlm,hc->blmc", h_hat,
                           p["W_Oe"].astype(jnp.bfloat16),
                           preferred_element_type=jnp.float32)
    else:
        e_mha = jnp.einsum("bhlm,hc->blmc", h_hat, p["W_Oe"])
    e_new = e_mha + p["b_Oe"] + e_r1
    e_r2 = e_new
    e_ln2 = layer_norm(e_new, p["ffn_ln_e_g"], p["ffn_ln_e_b"])
    e_new = jax.nn.elu(e_ln2 @ p["W_e1"] + p["b_e1"]) @ p["W_e2"] + p["b_e2"] + e_r2

    return h_new, e_new


if __name__ == "__main__":
    B, N = 2, 32
    node_width, edge_width, num_heads = 32, 16, 4
    D = node_width // num_heads

    key = jax.random.PRNGKey(0)
    k_h, k_e, k_p = jax.random.split(key, 3)
    h = jax.random.normal(k_h, (B, N, node_width), jnp.float32)
    e = jax.random.normal(k_e, (B, N, N, edge_width), jnp.float32)

    # additive mask (0 = keep, -1e9 = masked); mask the last 6 key columns of
    # batch element 1
    mask = jnp.zeros((B, N, N, 1), jnp.float32)
    mask = mask.at[1, :, N - 6:, 0].set(-1e9)

    params = init_params(k_p, node_width, edge_width, num_heads)

    fwd = jax.jit(functools.partial(egt_layer_forward, num_heads=num_heads))
    h_out, e_out = fwd(h, e, mask, params)
    jax.block_until_ready((h_out, e_out))

    # ---- correctness: Pallas attention core vs pure-JAX reference ----------
    p = params
    h_ln = layer_norm(h, p["ln_h_g"], p["ln_h_b"])
    e_ln = layer_norm(e, p["ln_e_g"], p["ln_e_b"])
    QKV = (h_ln @ p["W_QKV"] + p["b_QKV"]).reshape(B, N, 3 * D, num_heads)
    hm = lambda x: jnp.transpose(x, (0, 1, 3, 2)).reshape(B, N, num_heads * D)
    Q, K, V = hm(QKV[:, :, :D]), hm(QKV[:, :, D:2 * D]), hm(QKV[:, :, 2 * D:])
    W_EG = jnp.concatenate([p["W_E"], p["W_G"]], axis=1)
    b_EG = jnp.concatenate([p["b_E"], p["b_G"]], axis=0)
    EG = (jnp.einsum("ch,blmc->hblm", W_EG, e_ln)
          + b_EG[:, None, None, None]).astype(jnp.bfloat16)
    m2d = mask[..., 0]

    va_k, hh_k = egt_attention(Q, K, V, EG, m2d, num_heads=num_heads,
                               scale_dot=True, clip_min=-5.0, clip_max=5.0,
                               q_tile=16)           # 2 query-row tiles per batch
    va_r, hh_r = _attn_ref(Q, K, V, EG, m2d, num_heads=num_heads,
                           scale_dot=True, clip_min=-5.0, clip_max=5.0)
    assert jnp.allclose(va_k, va_r, atol=5e-3, rtol=5e-3), "V_att mismatch"
    assert jnp.allclose(hh_k.astype(jnp.float32), hh_r,
                        atol=6e-2, rtol=3e-2), "H_hat mismatch"

    # ---- correctness: full layer (Pallas) vs full layer (pure JAX) ----------
    h_ref, e_ref = egt_layer_forward(h, e, mask, params, num_heads=num_heads,
                                     use_pallas=False)
    assert jnp.allclose(h_out, h_ref, atol=3e-2, rtol=3e-2), "h mismatch"
    assert jnp.allclose(e_out, e_ref, atol=3e-2, rtol=3e-2), "e mismatch"
    assert h_out.shape == (B, N, node_width)
    assert e_out.shape == (B, N, N, edge_width)
    assert bool(jnp.all(jnp.isfinite(h_out))) and bool(jnp.all(jnp.isfinite(e_out)))

    print("KERNEL_OK")
</pallas_src>

<mosaic_0001>
module attributes {stable_mosaic.version = 11 : i64} {
  func.func @egt_attn_kernel(%arg0: i32, %arg1: i32, %arg2: memref<1x32x32xbf16, #tpu.memory_space<vmem>>, %arg3: memref<1x32x32xbf16, #tpu.memory_space<vmem>>, %arg4: memref<1x32x32xbf16, #tpu.memory_space<vmem>>, %arg5: memref<8x1x32x32xbf16, #tpu.memory_space<vmem>>, %arg6: memref<1x32x32xbf16, #tpu.memory_space<vmem>>, %arg7: memref<1x32x32xf32, #tpu.memory_space<vmem>>, %arg8: memref<1x4x32x32xbf16, #tpu.memory_space<vmem>>) attributes {dimension_semantics = [#tpu.dimension_semantics<parallel>, #tpu.dimension_semantics<arbitrary>], iteration_bounds = array<i64: 2, 1>, scalar_prefetch = 0 : i64, scratch_operands = 0 : i64, tpu.core_type = #tpu.core_type<tc>, window_params = [{transform_indices = @transform_0, window_bounds = array<i64: 1, 32, 32>}, {transform_indices = @transform_1, window_bounds = array<i64: 1, 32, 32>}, {transform_indices = @transform_2, window_bounds = array<i64: 1, 32, 32>}, {transform_indices = @transform_3, window_bounds = array<i64: 8, 1, 32, 32>}, {transform_indices = @transform_4, window_bounds = array<i64: 1, 32, 32>}, {transform_indices = @transform_5, window_bounds = array<i64: 1, 32, 32>}, {transform_indices = @transform_6, window_bounds = array<i64: 1, 4, 32, 32>}]} {
    %c0 = arith.constant 0 : index
    %c0_0 = arith.constant 0 : index
    %c0_1 = arith.constant 0 : index
    %0 = vector.load %arg2[%c0, %c0_0, %c0_1] : memref<1x32x32xbf16, #tpu.memory_space<vmem>>, vector<1x32x32xbf16>
    %1 = vector.shape_cast %0 : vector<1x32x32xbf16> to vector<32x32xbf16>
    %c0_2 = arith.constant 0 : index
    %c0_3 = arith.constant 0 : index
    %c0_4 = arith.constant 0 : index
    %2 = vector.load %arg3[%c0_2, %c0_3, %c0_4] : memref<1x32x32xbf16, #tpu.memory_space<vmem>>, vector<1x32x32xbf16>
    %3 = vector.shape_cast %2 : vector<1x32x32xbf16> to vector<32x32xbf16>
    %c0_5 = arith.constant 0 : index
    %c0_6 = arith.constant 0 : index
    %c0_7 = arith.constant 0 : index
    %4 = vector.load %arg4[%c0_5, %c0_6, %c0_7] : memref<1x32x32xbf16, #tpu.memory_space<vmem>>, vector<1x32x32xbf16>
    %5 = vector.shape_cast %4 : vector<1x32x32xbf16> to vector<32x32xbf16>
    %c0_8 = arith.constant 0 : index
    %c0_9 = arith.constant 0 : index
    %c0_10 = arith.constant 0 : index
    %6 = vector.load %arg6[%c0_8, %c0_9, %c0_10] : memref<1x32x32xbf16, #tpu.memory_space<vmem>>, vector<1x32x32xbf16>
    %7 = vector.shape_cast %6 : vector<1x32x32xbf16> to vector<32x32xbf16>
    %8 = arith.extf %7 : vector<32x32xbf16> to vector<32x32xf32>
    %9 = vector.extract_strided_slice %1 {offsets = [0, 0], sizes = [32, 8], strides = [1, 1]} : vector<32x32xbf16> to vector<32x8xbf16>
    %10 = vector.extract_strided_slice %3 {offsets = [0, 0], sizes = [32, 8], strides = [1, 1]} : vector<32x32xbf16> to vector<32x8xbf16>
    %11 = vector.extract_strided_slice %5 {offsets = [0, 0], sizes = [32, 8], strides = [1, 1]} : vector<32x32xbf16> to vector<32x8xbf16>
    %cst = arith.constant dense<0.000000e+00> : vector<32x32xf32>
    %12 = tpu.matmul %9, %10, %cst {dimension_numbers = #tpu.dot_dimension_numbers<[1], [1], [0], [0], [0, 0, 1, 0], [], []>} : vector<32x8xbf16>, vector<32x8xbf16>, vector<32x32xf32> -> vector<32x32xf32>
    %c0_11 = arith.constant 0 : index
    %c0_12 = arith.constant 0 : index
    %c0_13 = arith.constant 0 : index
    %c0_14 = arith.constant 0 : index
    %13 = vector.load %arg5[%c0_11, %c0_12, %c0_13, %c0_14] : memref<8x1x32x32xbf16, #tpu.memory_space<vmem>>, vector<1x1x32x32xbf16>
    %14 = vector.shape_cast %13 : vector<1x1x32x32xbf16> to vector<32x32xbf16>
    %15 = arith.extf %14 : vector<32x32xbf16> to vector<32x32xf32>
    %cst_15 = arith.constant -5.000000e+00 : f32
    %cst_16 = arith.constant 5.000000e+00 : f32
    %16 = vector.broadcast %cst_15 : f32 to vector<32x32xf32>
    %17 = arith.maximumf %16, %12 : vector<32x32xf32>
    %18 = vector.broadcast %cst_16 : f32 to vector<32x32xf32>
    %19 = arith.minimumf %18, %17 : vector<32x32xf32>
    %20 = arith.addf %19, %15 : vector<32x32xf32>
    %21 = arith.truncf %20 : vector<32x32xf32> to vector<32x32xbf16>
    %c0_17 = arith.constant 0 : index
    %c0_18 = arith.constant 0 : index
    %c0_19 = arith.constant 0 : index
    %c0_20 = arith.constant 0 : index
    %22 = vector.load %arg8[%c0_17, %c0_18, %c0_19, %c0_20] : memref<1x4x32x32xbf16, #tpu.memory_space<vmem>>, vector<1x1x32x32xbf16>
    %23 = vector.shape_cast %22 : vector<1x1x32x32xbf16> to vector<32x32xbf16>
    %24 = vector.shape_cast %21 : vector<32x32xbf16> to vector<1x1x32x32xbf16>
    tpu.vector_store %arg8[%c0_17, %c0_18, %c0_19, %c0_20], %24 {strides = array<i32>} : memref<1x4x32x32xbf16, #tpu.memory_space<vmem>>, vector<1x1x32x32xbf16>,
    %c4 = arith.constant 4 : index
    %c0_21 = arith.constant 0 : index
    %c0_22 = arith.constant 0 : index
    %c0_23 = arith.constant 0 : index
    %25 = vector.load %arg5[%c4, %c0_21, %c0_22, %c0_23] : memref<8x1x32x32xbf16, #tpu.memory_space<vmem>>, vector<1x1x32x32xbf16>
    %26 = vector.shape_cast %25 : vector<1x1x32x32xbf16> to vector<32x32xbf16>
    %27 = arith.extf %26 : vector<32x32xbf16> to vector<32x32xf32>
    %28 = arith.addf %20, %8 : vector<32x32xf32>
    %29 = arith.addf %27, %8 : vector<32x32xf32>
    %30 = arith.negf %29 : vector<32x32xf32>
    %31 = math.exp %30 : vector<32x32xf32>
    %cst_24 = arith.constant 1.000000e+00 : f32
    %32 = vector.broadcast %cst_24 : f32 to vector<32x32xf32>
    %33 = arith.addf %32, %31 : vector<32x32xf32>
    %34 = arith.divf %32, %33 : vector<32x32xf32>
    %cst_25 = arith.constant dense<0xFF800000> : vector<32xf32>
    %35 = vector.multi_reduction <maximumf>, %28, %cst_25 [1] : vector<32x32xf32> to vector<32xf32>
    %36 = vector.shape_cast %35 : vector<32xf32> to vector<32x1xf32>
    %37 = vector.broadcast %36 : vector<32x1xf32> to vector<32x32xf32>
    %38 = arith.subf %28, %37 : vector<32x32xf32>
    %39 = math.exp %38 : vector<32x32xf32>
    %cst_26 = arith.constant dense<0.000000e+00> : vector<32xf32>
    %40 = vector.multi_reduction <add>, %39, %cst_26 [1] : vector<32x32xf32> to vector<32xf32>
    %41 = vector.shape_cast %40 : vector<32xf32> to vector<32x1xf32>
    %42 = tpu.reciprocal %41 {approx = true} : vector<32x1xf32> -> vector<32x1xf32>
    %43 = vector.broadcast %42 : vector<32x1xf32> to vector<32x32xf32>
    %44 = arith.mulf %39, %43 : vector<32x32xf32>
    %45 = arith.mulf %44, %34 : vector<32x32xf32>
    %46 = arith.truncf %45 : vector<32x32xf32> to vector<32x32xbf16>
    %cst_27 = arith.constant dense<0.000000e+00> : vector<32x8xf32>
    %47 = tpu.matmul %46, %11, %cst_27 {dimension_numbers = #tpu.dot_dimension_numbers<[1], [0], [0], [1], [0, 0, 1, 1], [], []>} : vector<32x32xbf16>, vector<32x8xbf16>, vector<32x8xf32> -> vector<32x8xf32>
    %48 = vector.extract_strided_slice %1 {offsets = [0, 8], sizes = [32, 8], strides = [1, 1]} : vector<32x32xbf16> to vector<32x8xbf16>
    %49 = vector.extract_strided_slice %3 {offsets = [0, 8], sizes = [32, 8], strides = [1, 1]} : vector<32x32xbf16> to vector<32x8xbf16>
    %50 = vector.extract_strided_slice %5 {offsets = [0, 8], sizes = [32, 8], strides = [1, 1]} : vector<32x32xbf16> to vector<32x8xbf16>
    %cst_28 = arith.constant dense<0.000000e+00> : vector<32x32xf32>
    %51 = tpu.matmul %48, %49, %cst_28 {dimension_numbers = #tpu.dot_dimension_numbers<[1], [1], [0], [0], [0, 0, 1, 0], [], []>} : vector<32x8xbf16>, vector<32x8xbf16>, vector<32x32xf32> -> vector<32x32xf32>
    %c1 = arith.constant 1 : index
    %c0_29 = arith.constant 0 : index
    %c0_30 = arith.constant 0 : index
    %c0_31 = arith.constant 0 : index
    %52 = vector.load %arg5[%c1, %c0_29, %c0_30, %c0_31] : memref<8x1x32x32xbf16, #tpu.memory_space<vmem>>, vector<1x1x32x32xbf16>
    %53 = vector.shape_cast %52 : vector<1x1x32x32xbf16> to vector<32x32xbf16>
    %54 = arith.extf %53 : vector<32x32xbf16> to vector<32x32xf32>
    %cst_32 = arith.constant -5.000000e+00 : f32
    %cst_33 = arith.constant 5.000000e+00 : f32
    %55 = vector.broadcast %cst_32 : f32 to vector<32x32xf32>
    %56 = arith.maximumf %55, %51 : vector<32x32xf32>
    %57 = vector.broadcast %cst_33 : f32 to vector<32x32xf32>
    %58 = arith.minimumf %57, %56 : vector<32x32xf32>
    %59 = arith.addf %58, %54 : vector<32x32xf32>
    %60 = arith.truncf %59 : vector<32x32xf32> to vector<32x32xbf16>
    %c0_34 = arith.constant 0 : index
    %c1_35 = arith.constant 1 : index
    %c0_36 = arith.constant 0 : index
    %c0_37 = arith.constant 0 : index
    %61 = vector.load %arg8[%c0_34, %c1_35, %c0_36, %c0_37] : memref<1x4x32x32xbf16, #tpu.memory_space<vmem>>, vector<1x1x32x32xbf16>
    %62 = vector.shape_cast %61 : vector<1x1x32x32xbf16> to vector<32x32xbf16>
    %63 = vector.shape_cast %60 : vector<32x32xbf16> to vector<1x1x32x32xbf16>
    tpu.vector_store %arg8[%c0_34, %c1_35, %c0_36, %c0_37], %63 {strides = array<i32>} : memref<1x4x32x32xbf16, #tpu.memory_space<vmem>>, vector<1x1x32x32xbf16>,
    %c5 = arith.constant 5 : index
    %c0_38 = arith.constant 0 : index
    %c0_39 = arith.constant 0 : index
    %c0_40 = arith.constant 0 : index
    %64 = vector.load %arg5[%c5, %c0_38, %c0_39, %c0_40] : memref<8x1x32x32xbf16, #tpu.memory_space<vmem>>, vector<1x1x32x32xbf16>
    %65 = vector.shape_cast %64 : vector<1x1x32x32xbf16> to vector<32x32xbf16>
    %66 = arith.extf %65 : vector<32x32xbf16> to vector<32x32xf32>
    %67 = arith.addf %59, %8 : vector<32x32xf32>
    %68 = arith.addf %66, %8 : vector<32x32xf32>
    %69 = arith.negf %68 : vector<32x32xf32>
    %70 = math.exp %69 : vector<32x32xf32>
    %cst_41 = arith.constant 1.000000e+00 : f32
    %71 = vector.broadcast %cst_41 : f32 to vector<32x32xf32>
    %72 = arith.addf %71, %70 : vector<32x32xf32>
    %73 = arith.divf %71, %72 : vector<32x32xf32>
    %cst_42 = arith.constant dense<0xFF800000> : vector<32xf32>
    %74 = vector.multi_reduction <maximumf>, %67, %cst_42 [1] : vector<32x32xf32> to vector<32xf32>
    %75 = vector.shape_cast %74 : vector<32xf32> to vector<32x1xf32>
    %76 = vector.broadcast %75 : vector<32x1xf32> to vector<32x32xf32>
    %77 = arith.subf %67, %76 : vector<32x32xf32>
    %78 = math.exp %77 : vector<32x32xf32>
    %cst_43 = arith.constant dense<0.000000e+00> : vector<32xf32>
    %79 = vector.multi_reduction <add>, %78, %cst_43 [1] : vector<32x32xf32> to vector<32xf32>
    %80 = vector.shape_cast %79 : vector<32xf32> to vector<32x1xf32>
    %81 = tpu.reciprocal %80 {approx = true} : vector<32x1xf32> -> vector<32x1xf32>
    %82 = vector.broadcast %81 : vector<32x1xf32> to vector<32x32xf32>
    %83 = arith.mulf %78, %82 : vector<32x32xf32>
    %84 = arith.mulf %83, %73 : vector<32x32xf32>
    %85 = arith.truncf %84 : vector<32x32xf32> to vector<32x32xbf16>
    %cst_44 = arith.constant dense<0.000000e+00> : vector<32x8xf32>
    %86 = tpu.matmul %85, %50, %cst_44 {dimension_numbers = #tpu.dot_dimension_numbers<[1], [0], [0], [1], [0, 0, 1, 1], [], []>} : vector<32x32xbf16>, vector<32x8xbf16>, vector<32x8xf32> -> vector<32x8xf32>
    %87 = vector.extract_strided_slice %1 {offsets = [0, 16], sizes = [32, 8], strides = [1, 1]} : vector<32x32xbf16> to vector<32x8xbf16>
    %88 = vector.extract_strided_slice %3 {offsets = [0, 16], sizes = [32, 8], strides = [1, 1]} : vector<32x32xbf16> to vector<32x8xbf16>
    %89 = vector.extract_strided_slice %5 {offsets = [0, 16], sizes = [32, 8], strides = [1, 1]} : vector<32x32xbf16> to vector<32x8xbf16>
    %cst_45 = arith.constant dense<0.000000e+00> : vector<32x32xf32>
    %90 = tpu.matmul %87, %88, %cst_45 {dimension_numbers = #tpu.dot_dimension_numbers<[1], [1], [0], [0], [0, 0, 1, 0], [], []>} : vector<32x8xbf16>, vector<32x8xbf16>, vector<32x32xf32> -> vector<32x32xf32>
    %c2 = arith.constant 2 : index
    %c0_46 = arith.constant 0 : index
    %c0_47 = arith.constant 0 : index
    %c0_48 = arith.constant 0 : index
    %91 = vector.load %arg5[%c2, %c0_46, %c0_47, %c0_48] : memref<8x1x32x32xbf16, #tpu.memory_space<vmem>>, vector<1x1x32x32xbf16>
    %92 = vector.shape_cast %91 : vector<1x1x32x32xbf16> to vector<32x32xbf16>
    %93 = arith.extf %92 : vector<32x32xbf16> to vector<32x32xf32>
    %cst_49 = arith.constant -5.000000e+00 : f32
    %cst_50 = arith.constant 5.000000e+00 : f32
    %94 = vector.broadcast %cst_49 : f32 to vector<32x32xf32>
    %95 = arith.maximumf %94, %90 : vector<32x32xf32>
    %96 = vector.broadcast %cst_50 : f32 to vector<32x32xf32>
    %97 = arith.minimumf %96, %95 : vector<32x32xf32>
    %98 = arith.addf %97, %93 : vector<32x32xf32>
    %99 = arith.truncf %98 : vector<32x32xf32> to vector<32x32xbf16>
    %c0_51 = arith.constant 0 : index
    %c2_52 = arith.constant 2 : index
    %c0_53 = arith.constant 0 : index
    %c0_54 = arith.constant 0 : index
    %100 = vector.load %arg8[%c0_51, %c2_52, %c0_53, %c0_54] : memref<1x4x32x32xbf16, #tpu.memory_space<vmem>>, vector<1x1x32x32xbf16>
    %101 = vector.shape_cast %100 : vector<1x1x32x32xbf16> to vector<32x32xbf16>
    %102 = vector.shape_cast %99 : vector<32x32xbf16> to vector<1x1x32x32xbf16>
    tpu.vector_store %arg8[%c0_51, %c2_52, %c0_53, %c0_54], %102 {strides = array<i32>} : memref<1x4x32x32xbf16, #tpu.memory_space<vmem>>, vector<1x1x32x32xbf16>,
    %c6 = arith.constant 6 : index
    %c0_55 = arith.constant 0 : index
    %c0_56 = arith.constant 0 : index
    %c0_57 = arith.constant 0 : index
    %103 = vector.load %arg5[%c6, %c0_55, %c0_56, %c0_57] : memref<8x1x32x32xbf16, #tpu.memory_space<vmem>>, vector<1x1x32x32xbf16>
    %104 = vector.shape_cast %103 : vector<1x1x32x32xbf16> to vector<32x32xbf16>
    %105 = arith.extf %104 : vector<32x32xbf16> to vector<32x32xf32>
    %106 = arith.addf %98, %8 : vector<32x32xf32>
    %107 = arith.addf %105, %8 : vector<32x32xf32>
    %108 = arith.negf %107 : vector<32x32xf32>
    %109 = math.exp %108 : vector<32x32xf32>
    %cst_58 = arith.constant 1.000000e+00 : f32
    %110 = vector.broadcast %cst_58 : f32 to vector<32x32xf32>
    %111 = arith.addf %110, %109 : vector<32x32xf32>
    %112 = arith.divf %110, %111 : vector<32x32xf32>
    %cst_59 = arith.constant dense<0xFF800000> : vector<32xf32>
    %113 = vector.multi_reduction <maximumf>, %106, %cst_59 [1] : vector<32x32xf32> to vector<32xf32>
    %114 = vector.shape_cast %113 : vector<32xf32> to vector<32x1xf32>
    %115 = vector.broadcast %114 : vector<32x1xf32> to vector<32x32xf32>
    %116 = arith.subf %106, %115 : vector<32x32xf32>
    %117 = math.exp %116 : vector<32x32xf32>
    %cst_60 = arith.constant dense<0.000000e+00> : vector<32xf32>
    %118 = vector.multi_reduction <add>, %117, %cst_60 [1] : vector<32x32xf32> to vector<32xf32>
    %119 = vector.shape_cast %118 : vector<32xf32> to vector<32x1xf32>
    %120 = tpu.reciprocal %119 {approx = true} : vector<32x1xf32> -> vector<32x1xf32>
    %121 = vector.broadcast %120 : vector<32x1xf32> to vector<32x32xf32>
    %122 = arith.mulf %117, %121 : vector<32x32xf32>
    %123 = arith.mulf %122, %112 : vector<32x32xf32>
    %124 = arith.truncf %123 : vector<32x32xf32> to vector<32x32xbf16>
    %cst_61 = arith.constant dense<0.000000e+00> : vector<32x8xf32>
    %125 = tpu.matmul %124, %89, %cst_61 {dimension_numbers = #tpu.dot_dimension_numbers<[1], [0], [0], [1], [0, 0, 1, 1], [], []>} : vector<32x32xbf16>, vector<32x8xbf16>, vector<32x8xf32> -> vector<32x8xf32>
    %126 = vector.extract_strided_slice %1 {offsets = [0, 24], sizes = [32, 8], strides = [1, 1]} : vector<32x32xbf16> to vector<32x8xbf16>
    %127 = vector.extract_strided_slice %3 {offsets = [0, 24], sizes = [32, 8], strides = [1, 1]} : vector<32x32xbf16> to vector<32x8xbf16>
    %128 = vector.extract_strided_slice %5 {offsets = [0, 24], sizes = [32, 8], strides = [1, 1]} : vector<32x32xbf16> to vector<32x8xbf16>
    %cst_62 = arith.constant dense<0.000000e+00> : vector<32x32xf32>
    %129 = tpu.matmul %126, %127, %cst_62 {dimension_numbers = #tpu.dot_dimension_numbers<[1], [1], [0], [0], [0, 0, 1, 0], [], []>} : vector<32x8xbf16>, vector<32x8xbf16>, vector<32x32xf32> -> vector<32x32xf32>
    %c3 = arith.constant 3 : index
    %c0_63 = arith.constant 0 : index
    %c0_64 = arith.constant 0 : index
    %c0_65 = arith.constant 0 : index
    %130 = vector.load %arg5[%c3, %c0_63, %c0_64, %c0_65] : memref<8x1x32x32xbf16, #tpu.memory_space<vmem>>, vector<1x1x32x32xbf16>
    %131 = vector.shape_cast %130 : vector<1x1x32x32xbf16> to vector<32x32xbf16>
    %132 = arith.extf %131 : vector<32x32xbf16> to vector<32x32xf32>
    %cst_66 = arith.constant -5.000000e+00 : f32
    %cst_67 = arith.constant 5.000000e+00 : f32
    %133 = vector.broadcast %cst_66 : f32 to vector<32x32xf32>
    %134 = arith.maximumf %133, %129 : vector<32x32xf32>
    %135 = vector.broadcast %cst_67 : f32 to vector<32x32xf32>
    %136 = arith.minimumf %135, %134 : vector<32x32xf32>
    %137 = arith.addf %136, %132 : vector<32x32xf32>
    %138 = arith.truncf %137 : vector<32x32xf32> to vector<32x32xbf16>
    %c0_68 = arith.constant 0 : index
    %c3_69 = arith.constant 3 : index
    %c0_70 = arith.constant 0 : index
    %c0_71 = arith.constant 0 : index
    %139 = vector.load %arg8[%c0_68, %c3_69, %c0_70, %c0_71] : memref<1x4x32x32xbf16, #tpu.memory_space<vmem>>, vector<1x1x32x32xbf16>
    %140 = vector.shape_cast %139 : vector<1x1x32x32xbf16> to vector<32x32xbf16>
    %141 = vector.shape_cast %138 : vector<32x32xbf16> to vector<1x1x32x32xbf16>
    tpu.vector_store %arg8[%c0_68, %c3_69, %c0_70, %c0_71], %141 {strides = array<i32>} : memref<1x4x32x32xbf16, #tpu.memory_space<vmem>>, vector<1x1x32x32xbf16>,
    %c7 = arith.constant 7 : index
    %c0_72 = arith.constant 0 : index
    %c0_73 = arith.constant 0 : index
    %c0_74 = arith.constant 0 : index
    %142 = vector.load %arg5[%c7, %c0_72, %c0_73, %c0_74] : memref<8x1x32x32xbf16, #tpu.memory_space<vmem>>, vector<1x1x32x32xbf16>
    %143 = vector.shape_cast %142 : vector<1x1x32x32xbf16> to vector<32x32xbf16>
    %144 = arith.extf %143 : vector<32x32xbf16> to vector<32x32xf32>
    %145 = arith.addf %137, %8 : vector<32x32xf32>
    %146 = arith.addf %144, %8 : vector<32x32xf32>
    %147 = arith.negf %146 : vector<32x32xf32>
    %148 = math.exp %147 : vector<32x32xf32>
    %cst_75 = arith.constant 1.000000e+00 : f32
    %149 = vector.broadcast %cst_75 : f32 to vector<32x32xf32>
    %150 = arith.addf %149, %148 : vector<32x32xf32>
    %151 = arith.divf %149, %150 : vector<32x32xf32>
    %cst_76 = arith.constant dense<0xFF800000> : vector<32xf32>
    %152 = vector.multi_reduction <maximumf>, %145, %cst_76 [1] : vector<32x32xf32> to vector<32xf32>
    %153 = vector.shape_cast %152 : vector<32xf32> to vector<32x1xf32>
    %154 = vector.broadcast %153 : vector<32x1xf32> to vector<32x32xf32>
    %155 = arith.subf %145, %154 : vector<32x32xf32>
    %156 = math.exp %155 : vector<32x32xf32>
    %cst_77 = arith.constant dense<0.000000e+00> : vector<32xf32>
    %157 = vector.multi_reduction <add>, %156, %cst_77 [1] : vector<32x32xf32> to vector<32xf32>
    %158 = vector.shape_cast %157 : vector<32xf32> to vector<32x1xf32>
    %159 = tpu.reciprocal %158 {approx = true} : vector<32x1xf32> -> vector<32x1xf32>
    %160 = vector.broadcast %159 : vector<32x1xf32> to vector<32x32xf32>
    %161 = arith.mulf %156, %160 : vector<32x32xf32>
    %162 = arith.mulf %161, %151 : vector<32x32xf32>
    %163 = arith.truncf %162 : vector<32x32xf32> to vector<32x32xbf16>
    %cst_78 = arith.constant dense<0.000000e+00> : vector<32x8xf32>
    %164 = tpu.matmul %163, %128, %cst_78 {dimension_numbers = #tpu.dot_dimension_numbers<[1], [0], [0], [1], [0, 0, 1, 1], [], []>} : vector<32x32xbf16>, vector<32x8xbf16>, vector<32x8xf32> -> vector<32x8xf32>
    %165 = tpu.concatenate %47, %86, %125, %164 in 1 : vector<32x8xf32>, vector<32x8xf32>, vector<32x8xf32>, vector<32x8xf32> -> vector<32x32xf32>
    %c0_79 = arith.constant 0 : index
    %c0_80 = arith.constant 0 : index
    %c0_81 = arith.constant 0 : index
    %166 = vector.load %arg7[%c0_79, %c0_80, %c0_81] : memref<1x32x32xf32, #tpu.memory_space<vmem>>, vector<1x32x32xf32>
    %167 = vector.shape_cast %166 : vector<1x32x32xf32> to vector<32x32xf32>
    %168 = vector.shape_cast %165 : vector<32x32xf32> to vector<1x32x32xf32>
    tpu.vector_store %arg7[%c0_79, %c0_80, %c0_81], %168 {strides = array<i32>} : memref<1x32x32xf32, #tpu.memory_space<vmem>>, vector<1x32x32xf32>,
    return
  }
  func.func @transform_0(%arg0: i32, %arg1: i32) -> (i32, i32, i32) {
    %c0_i32 = arith.constant 0 : i32
    %c0_i32_0 = arith.constant 0 : i32
    return %arg0, %arg1, %c0_i32 : i32, i32, i32
  }
  func.func @transform_1(%arg0: i32, %arg1: i32) -> (i32, i32, i32) {
    %c0_i32 = arith.constant 0 : i32
    %c0_i32_0 = arith.constant 0 : i32
    %c0_i32_1 = arith.constant 0 : i32
    return %arg0, %c0_i32, %c0_i32_0 : i32, i32, i32
  }
  func.func @transform_2(%arg0: i32, %arg1: i32) -> (i32, i32, i32) {
    %c0_i32 = arith.constant 0 : i32
    %c0_i32_0 = arith.constant 0 : i32
    %c0_i32_1 = arith.constant 0 : i32
    return %arg0, %c0_i32, %c0_i32_0 : i32, i32, i32
  }
  func.func @transform_3(%arg0: i32, %arg1: i32) -> (i32, i32, i32, i32) {
    %c0_i32 = arith.constant 0 : i32
    %c0_i32_0 = arith.constant 0 : i32
    %c0_i32_1 = arith.constant 0 : i32
    return %c0_i32, %arg0, %arg1, %c0_i32_0 : i32, i32, i32, i32
  }
  func.func @transform_4(%arg0: i32, %arg1: i32) -> (i32, i32, i32) {
    %c0_i32 = arith.constant 0 : i32
    %c0_i32_0 = arith.constant 0 : i32
    return %arg0, %arg1, %c0_i32 : i32, i32, i32
  }
  func.func @transform_5(%arg0: i32, %arg1: i32) -> (i32, i32, i32) {
    %c0_i32 = arith.constant 0 : i32
    %c0_i32_0 = arith.constant 0 : i32
    return %arg0, %arg1, %c0_i32 : i32, i32, i32
  }
  func.func @transform_6(%arg0: i32, %arg1: i32) -> (i32, i32, i32, i32) {
    %c0_i32 = arith.constant 0 : i32
    %c0_i32_0 = arith.constant 0 : i32
    %c0_i32_1 = arith.constant 0 : i32
    return %arg0, %c0_i32, %arg1, %c0_i32_0 : i32, i32, i32, i32
  }
}

</mosaic_0001>

<llo_original>
// kernel: egt_layer_forward.1
$region0: #{egt_layer_forward.1}
  #allocation0 [shape = 'u32[]', space=smem, size = 0x4, offset = 0x4, fixed_abs, tag = 'smem constant byte address 0x4 - core index']
  #allocation1 [shape = 'u32[144,128]{1,0:T(1,128)}', space=vmem, size = 0x12000, scoped, tag = 'internal scratch']
  %s0 = inlined_call_operand.vmem [shape: bf16[2,32,32], index: 0, kind: input, shape index: {}]
  %s1 = inlined_call_operand.vmem [shape: bf16[2,32,32], index: 1, kind: input, shape index: {}]
  %s2 = inlined_call_operand.vmem [shape: bf16[2,32,32], index: 2, kind: input, shape index: {}]
  %s3 = inlined_call_operand.vmem [shape: bf16[8,2,32,32], index: 3, kind: input, shape index: {}]
  %s4 = inlined_call_operand.vmem [shape: bf16[2,32,32], index: 4, kind: input, shape index: {}]
  %s5 = inlined_call_operand.vmem [shape: f32[2,32,32], index: 5, kind: output, shape index: {0}]
  %s6 = inlined_call_operand.vmem [shape: bf16[2,4,32,32], index: 6, kind: output, shape index: {1}]
  %7 = xla_tuple %s5, %s6
  %s8 = sld [smem:[#allocation0]]
  $region102: #{egt_layer_forward.1} parent=0
    _
  %s10 = ssub.s32 1, %s8
  %s11 = scalar_select 0, %s10, %s8
  $region1: #{egt_layer_forward.1} parent=0
    #allocation2 [shape = 'u8[131072]{0}', space=vmem, size = 0x20000, scoped, tag = 'input window, operand 3']
    loop: start=0, step=1, limit=4
    $region2: #{egt_layer_forward.1} parent=1 // loop_pre_header
      _
    $region3: #{egt_layer_forward.1} parent=1 // loop_header
      %s13 = sphi 0, %s17
      %p14 = scmp.ge.s32.totalorder %s13, 4
      %s20 = sphi 0, %s32
      %s21 = sphi 0, %s28
      %s22 = sphi 0, %s20
      %s23 = sphi 0, %s21
      %s24 = sphi 0, %s22
      %s25 = sphi 0, %s23
      %s37 = sphi 0, %s39
      %s40 = sphi 0, %s37
      %s41 = sphi 0, %s40
      %s57 = sphi 0, %s41
      %s63 = sphi 0, %s65
      %s66 = sphi 0, %s63
      %s67 = sphi 0, %s66
      %s83 = sphi 0, %s67
      %s89 = sphi 0, %s91
      %s92 = sphi 0, %s89
      %s93 = sphi 0, %s92
      %s109 = sphi 0, %s93
      %s117 = sphi 0, %s119
      %s120 = sphi 0, %s117
      %s121 = sphi 0, %s120
      %s137 = sphi 0, %s121
      %s145 = sphi 0, %s147
      %s148 = sphi 0, %s145
      %s149 = sphi 0, %s148
      %s165 = sphi 0, %s149
      %s173 = sphi 0, %s175
      %s176 = sphi 0, %s173
      %s177 = sphi 0, %s176
      %s193 = sphi 0, %s177
      %s201 = sphi 0, %s203
      %s204 = sphi 0, %s201
      %s205 = sphi 0, %s204
      %s221 = sphi 0, %s205
    $region4: #{egt_layer_forward.1} parent=1 // loop_header_branch
      %16 = sbr.rel (%p14) target = $region8
    $region5: #{egt_layer_forward.1} parent=1 // loop_body
      %s18 = ssub.s32 %s13, 1
      %s19 = ssub.s32 %s13, 2
      %s26 = sadd.s32 1, %s21
      %p27 = scmp.ge.s32.totalorder %s26, 1
      %s28 = scalar_select %p27, 0, %s26
      %s29 = sadd.s32 1, %s20
      %s30 = scalar_select %p27, %s29, %s20
      %p31 = scmp.ge.s32.totalorder %s30, 2
      %s32 = scalar_select %p31, 0, %s30
      %s33 = ssub.s32 %s20, %s32
      %s34 = ssub.s32 %s21, %s28
      %s35 = sor.u32 %s33, %s34
      %p36 = scmp.eq.s32.totalorder %s35, 0
      %s38 = sadd.s32 %s37, 1
      %s39 = scalar_select %p36, %s37, %s38
      %p42 = pneg %p36
      %p43 = scmp.eq.s32.totalorder %s13, 1
      %p44 = por %p42, %p43
      %p45 = scmp.ne.s32.totalorder %s37, %s40
      %p46 = scmp.eq.s32.totalorder %s13, 0
      %p47 = por %p45, %p46
      %p48 = scmp.ne.s32.totalorder %s37, %s40
      %p49 = scmp.eq.s32.totalorder %s18, 1
      %p50 = por %p48, %p49
      %p51 = scmp.ne.s32.totalorder %s40, %s41
      %p52 = scmp.eq.s32.totalorder %s18, 0
      %p53 = por %p51, %p52
      %p54 = scmp.ne.s32.totalorder %s40, %s41
      %p55 = scmp.eq.s32.totalorder %s19, 1
      %p56 = por %p54, %p55
      %p58 = scmp.ne.s32.totalorder %s41, %s57
      %p59 = scmp.eq.s32.totalorder %s19, 0
      %p60 = por %p58, %p59
      %s61 = ssub.s32 %s20, %s32
      %p62 = scmp.eq.s32.totalorder %s61, 0
      %s64 = sadd.s32 %s63, 1
      %s65 = scalar_select %p62, %s63, %s64
      %p68 = pneg %p62
      %p69 = scmp.eq.s32.totalorder %s13, 1
      %p70 = por %p68, %p69
      %p71 = scmp.ne.s32.totalorder %s63, %s66
      %p72 = scmp.eq.s32.totalorder %s13, 0
      %p73 = por %p71, %p72
      %p74 = scmp.ne.s32.totalorder %s63, %s66
      %p75 = scmp.eq.s32.totalorder %s18, 1
      %p76 = por %p74, %p75
      %p77 = scmp.ne.s32.totalorder %s66, %s67
      %p78 = scmp.eq.s32.totalorder %s18, 0
      %p79 = por %p77, %p78
      %p80 = scmp.ne.s32.totalorder %s66, %s67
      %p81 = scmp.eq.s32.totalorder %s19, 1
      %p82 = por %p80, %p81
      %p84 = scmp.ne.s32.totalorder %s67, %s83
      %p85 = scmp.eq.s32.totalorder %s19, 0
      %p86 = por %p84, %p85
      %s87 = ssub.s32 %s20, %s32
      %p88 = scmp.eq.s32.totalorder %s87, 0
      %s90 = sadd.s32 %s89, 1
      %s91 = scalar_select %p88, %s89, %s90
      %p94 = pneg %p88
      %p95 = scmp.eq.s32.totalorder %s13, 1
      %p96 = por %p94, %p95
      %p97 = scmp.ne.s32.totalorder %s89, %s92
      %p98 = scmp.eq.s32.totalorder %s13, 0
      %p99 = por %p97, %p98
      %p100 = scmp.ne.s32.totalorder %s89, %s92
      %p101 = scmp.eq.s32.totalorder %s18, 1
      %p102 = por %p100, %p101
      %p103 = scmp.ne.s32.totalorder %s92, %s93
      %p104 = scmp.eq.s32.totalorder %s18, 0
      %p105 = por %p103, %p104
      %p106 = scmp.ne.s32.totalorder %s92, %s93
      %p107 = scmp.eq.s32.totalorder %s19, 1
      %p108 = por %p106, %p107
      %p110 = scmp.ne.s32.totalorder %s93, %s109
      %p111 = scmp.eq.s32.totalorder %s19, 0
      %p112 = por %p110, %p111
      %s113 = ssub.s32 %s20, %s32
      %s114 = ssub.s32 %s21, %s28
      %s115 = sor.u32 %s113, %s114
      %p116 = scmp.eq.s32.totalorder %s115, 0
      %s118 = sadd.s32 %s117, 1
      %s119 = scalar_select %p116, %s117, %s118
      %p122 = pneg %p116
      %p123 = scmp.eq.s32.totalorder %s13, 1
      %p124 = por %p122, %p123
      %p125 = scmp.ne.s32.totalorder %s117, %s120
      %p126 = scmp.eq.s32.totalorder %s13, 0
      %p127 = por %p125, %p126
      %p128 = scmp.ne.s32.totalorder %s117, %s120
      %p129 = scmp.eq.s32.totalorder %s18, 1
      %p130 = por %p128, %p129
      %p131 = scmp.ne.s32.totalorder %s120, %s121
      %p132 = scmp.eq.s32.totalorder %s18, 0
      %p133 = por %p131, %p132
      %p134 = scmp.ne.s32.totalorder %s120, %s121
      %p135 = scmp.eq.s32.totalorder %s19, 1
      %p136 = por %p134, %p135
      %p138 = scmp.ne.s32.totalorder %s121, %s137
      %p139 = scmp.eq.s32.totalorder %s19, 0
      %p140 = por %p138, %p139
      %s141 = ssub.s32 %s20, %s32
      %s142 = ssub.s32 %s21, %s28
      %s143 = sor.u32 %s141, %s142
      %p144 = scmp.eq.s32.totalorder %s143, 0
      %s146 = sadd.s32 %s145, 1
      %s147 = scalar_select %p144, %s145, %s146
      %p150 = pneg %p144
      %p151 = scmp.eq.s32.totalorder %s13, 1
      %p152 = por %p150, %p151
      %p153 = scmp.ne.s32.totalorder %s145, %s148
      %p154 = scmp.eq.s32.totalorder %s13, 0
      %p155 = por %p153, %p154
      %p156 = scmp.ne.s32.totalorder %s145, %s148
      %p157 = scmp.eq.s32.totalorder %s18, 1
      %p158 = por %p156, %p157
      %p159 = scmp.ne.s32.totalorder %s148, %s149
      %p160 = scmp.eq.s32.totalorder %s18, 0
      %p161 = por %p159, %p160
      %p162 = scmp.ne.s32.totalorder %s148, %s149
      %p163 = scmp.eq.s32.totalorder %s19, 1
      %p164 = por %p162, %p163
      %p166 = scmp.ne.s32.totalorder %s149, %s165
      %p167 = scmp.eq.s32.totalorder %s19, 0
      %p168 = por %p166, %p167
      %s169 = ssub.s32 %s20, %s32
      %s170 = ssub.s32 %s21, %s28
      %s171 = sor.u32 %s169, %s170
      %p172 = scmp.eq.s32.totalorder %s171, 0
      %s174 = sadd.s32 %s173, 1
      %s175 = scalar_select %p172, %s173, %s174
      %p178 = pneg %p172
      %p179 = scmp.eq.s32.totalorder %s13, 1
      %p180 = por %p178, %p179
      %p181 = scmp.ne.s32.totalorder %s173, %s176
      %p182 = scmp.eq.s32.totalorder %s13, 0
      %p183 = por %p181, %p182
      %p184 = scmp.ne.s32.totalorder %s173, %s176
      %p185 = scmp.eq.s32.totalorder %s18, 1
      %p186 = por %p184, %p185
      %p187 = scmp.ne.s32.totalorder %s176, %s177
      %p188 = scmp.eq.s32.totalorder %s18, 0
      %p189 = por %p187, %p188
      %p190 = scmp.ne.s32.totalorder %s176, %s177
      %p191 = scmp.eq.s32.totalorder %s19, 1
      %p192 = por %p190, %p191
      %p194 = scmp.ne.s32.totalorder %s177, %s193
      %p195 = scmp.eq.s32.totalorder %s19, 0
      %p196 = por %p194, %p195
      %s197 = ssub.s32 %s20, %s32
      %s198 = ssub.s32 %s21, %s28
      %s199 = sor.u32 %s197, %s198
      %p200 = scmp.eq.s32.totalorder %s199, 0
      %s202 = sadd.s32 %s201, 1
      %s203 = scalar_select %p200, %s201, %s202
      %p206 = pneg %p200
      %p207 = scmp.eq.s32.totalorder %s13, 1
      %p208 = por %p206, %p207
      %p209 = scmp.ne.s32.totalorder %s201, %s204
      %p210 = scmp.eq.s32.totalorder %s13, 0
      %p211 = por %p209, %p210
      %p212 = scmp.ne.s32.totalorder %s201, %s204
      %p213 = scmp.eq.s32.totalorder %s18, 1
      %p214 = por %p212, %p213
      %p215 = scmp.ne.s32.totalorder %s204, %s205
      %p216 = scmp.eq.s32.totalorder %s18, 0
      %p217 = por %p215, %p216
      %p218 = scmp.ne.s32.totalorder %s204, %s205
      %p219 = scmp.eq.s32.totalorder %s19, 1
      %p220 = por %p218, %p219
      %p222 = scmp.ne.s32.totalorder %s205, %s221
      %p223 = scmp.eq.s32.totalorder %s19, 0
      %p224 = por %p222, %p223
      %p225 = scmp.le.s32.totalorder 1, %s13
      %p226 = scmp.lt.s32.totalorder %s13, 3
      %p227 = pnand %p225, %p226
      %p228 = pneg %p227
      // Predicated region
      $region9: #{egt_layer_forward.1} parent=5 // pred_check
        _
      $region10: #{egt_layer_forward.1} parent=5 // pred_check_branch
        %230 = sbr.rel (%p227) target = $region12
      $region11: #{egt_layer_forward.1} parent=5 // pred_region
        %s231 = ssub.s32 %s13, 1
      $region12: #{egt_layer_forward.1} parent=5 // pred_fallthru
        _
      %p232 = scmp.lt.s32.totalorder %s13, 2
      // Predicated region
      $region13: #{egt_layer_forward.1} parent=5 // pred_check
        %p233 = pneg %p232
      $region14: #{egt_layer_forward.1} parent=5 // pred_check_branch
        %235 = sbr.rel (%p233) target = $region16
      $region15: #{egt_layer_forward.1} parent=5 // pred_region
        // Predicated region
        $region17: #{egt_layer_forward.1} parent=15 // pred_check
          %p236 = pneg %p47
        $region18: #{egt_layer_forward.1} parent=15 // pred_check_branch
          %238 = sbr.rel (%p236) target = $region20
        $region19: #{egt_layer_forward.1} parent=15 // pred_region
          %s239 = smul.u32 4, %s21
          %p240 = scmp.lt.s32.totalorder %s20, 1
          %s241 = scalar_select %p240, %s20, 1
          %p242 = scmp.lt.s32.totalorder %s239, 3
          %s243 = scalar_select %p242, %s239, 3
          %s244 = smul.addr %s241, 4
          %s245 = sadd.s32 %s243, %s244
          %s246 = smul.addr %s245, 4
          %s247 = scalar_lea.vmem %s0, %s246
          %s248 = smul.u32 4, %s21
        $region20: #{egt_layer_forward.1} parent=15 // pred_fallthru
          _
        // Predicated region
        $region21: #{egt_layer_forward.1} parent=15 // pred_check
          %p249 = pneg %p73
        $region22: #{egt_layer_forward.1} parent=15 // pred_check_branch
          %251 = sbr.rel (%p249) target = $region24
        $region23: #{egt_layer_forward.1} parent=15 // pred_region
          %p252 = scmp.lt.s32.totalorder %s20, 1
          %s253 = scalar_select %p252, %s20, 1
          %s254 = smul.addr %s253, 4
          %s255 = smul.addr %s254, 4
          %s256 = scalar_lea.vmem %s1, %s255
        $region24: #{egt_layer_forward.1} parent=15 // pred_fallthru
          _
        // Predicated region
        $region25: #{egt_layer_forward.1} parent=15 // pred_check
          %p257 = pneg %p99
        $region26: #{egt_layer_forward.1} parent=15 // pred_check_branch
          %259 = sbr.rel (%p257) target = $region28
        $region27: #{egt_layer_forward.1} parent=15 // pred_region
          %p260 = scmp.lt.s32.totalorder %s20, 1
          %s261 = scalar_select %p260, %s20, 1
          %s262 = smul.addr %s261, 4
          %s263 = smul.addr %s262, 4
          %s264 = scalar_lea.vmem %s2, %s263
        $region28: #{egt_layer_forward.1} parent=15 // pred_fallthru
          _
        // Predicated region
        $region29: #{egt_layer_forward.1} parent=15 // pred_check
          %p265 = pneg %p127
        $region30: #{egt_layer_forward.1} parent=15 // pred_check_branch
          %267 = sbr.rel (%p265) target = $region32
        $region31: #{egt_layer_forward.1} parent=15 // pred_region
          %s268 = sand.u32 %s117, 1
          %s269 = sand.u32 %s117, 1
          %s270 = smul.addr %s269, 128
          %s271 = scalar_lea.vmem [#allocation2], %s270
          %s272 = smul.u32 4, %s21
          %s273 = smul.addr %s20, 4
          %s274 = sadd.s32 %s272, %s273
          %s275 = smul.addr %s274, 4
          %s276 = scalar_lea.vmem %s3, %s275
          // Predicated region
          $region33: #{egt_layer_forward.1} parent=31 // pred_check
            _
          $region34: #{egt_layer_forward.1} parent=31 // pred_check_branch
            %278 = sbr.rel (0) target = $region36
          $region35: #{egt_layer_forward.1} parent=31 // pred_region
            // Predicated region
            $region37: #{egt_layer_forward.1} parent=35 // pred_check
              _
            $region38: #{egt_layer_forward.1} parent=35 // pred_check_branch
              %280 = sbr.rel target = $region40
            $region39: #{egt_layer_forward.1} parent=35 // pred_region
              // Predicated region
              $region52: #{egt_layer_forward.1} parent=39 // pred_check
                _
              $region53: #{egt_layer_forward.1} parent=39 // pred_check_branch
                %358 = sbr.rel (0) target = $region55
              $region54: #{egt_layer_forward.1} parent=39 // pred_region
                loop: start=0, step=1, limit=1
                $region56: #{egt_layer_forward.1} parent=54 // loop_pre_header
                  _
                $region57: #{egt_layer_forward.1} parent=54 // loop_header
                  %s360 = sphi 0, %s364
                  %p361 = scmp.ge.s32.totalorder %s360, 1
                  %s365 = sphi %s276, %s276
                  %s366 = sphi %s271, %s271
                $region58: #{egt_layer_forward.1} parent=54 // loop_header_branch
                  %363 = sbr.rel (%p361) target = $region62
                $region59: #{egt_layer_forward.1} parent=54 // loop_body
                  _
                $region60: #{egt_layer_forward.1} parent=54 // loop_footer
                  %s364 = sadd.s32 1, %s360
                $region61: #{egt_layer_forward.1} parent=54 // loop_footer_branch
                  %359 = sbr.rel target = $region57
                $region62: #{egt_layer_forward.1} parent=54 // loop_exit
                  _
                %s368 = ssub.s32 16, 1
                loop: start=0, step=1, limit=1
                $region63: #{egt_layer_forward.1} parent=54 // loop_pre_header
                  _
                $region64: #{egt_layer_forward.1} parent=54 // loop_header
                  %s370 = sphi 0, %s374
                  %p371 = scmp.ge.s32.totalorder %s370, 1
                  %s375 = sphi %s276, %s276
                  %s376 = sphi %s271, %s271
                $region65: #{egt_layer_forward.1} parent=54 // loop_header_branch
                  %373 = sbr.rel (%p371) target = $region69
                $region66: #{egt_layer_forward.1} parent=54 // loop_body
                  %v377 = vld [vmem:[%s375] sm:%s368]
                  %378 = vst [vmem:[%s376] sm:%s368] %v377
                  %v379 = vld [vmem:[%s375 + $0x4] sm:%s368]
                  %380 = vst [vmem:[%s376 + $0x4] sm:%s368] %v379
                  %v381 = vld [vmem:[%s375 + $0x8] sm:%s368]
                  %382 = vst [vmem:[%s376 + $0x8] sm:%s368] %v381
                  %v383 = vld [vmem:[%s375 + $0xc] sm:%s368]
                  %384 = vst [vmem:[%s376 + $0xc] sm:%s368] %v383
                  %v385 = vld [vmem:[%s375 + $0x20] sm:%s368]
                  %386 = vst [vmem:[%s376 + $0x10] sm:%s368] %v385
                  %v387 = vld [vmem:[%s375 + $0x24] sm:%s368]
                  %388 = vst [vmem:[%s376 + $0x14] sm:%s368] %v387
                  %v389 = vld [vmem:[%s375 + $0x28] sm:%s368]
                  %390 = vst [vmem:[%s376 + $0x18] sm:%s368] %v389
                  %v391 = vld [vmem:[%s375 + $0x2c] sm:%s368]
                  %392 = vst [vmem:[%s376 + $0x1c] sm:%s368] %v391
                  %v393 = vld [vmem:[%s375 + $0x40] sm:%s368]
                  %394 = vst [vmem:[%s376 + $0x20] sm:%s368] %v393
                  %v395 = vld [vmem:[%s375 + $0x44] sm:%s368]
                  %396 = vst [vmem:[%s376 + $0x24] sm:%s368] %v395
                  %v397 = vld [vmem:[%s375 + $0x48] sm:%s368]
                  %398 = vst [vmem:[%s376 + $0x28] sm:%s368] %v397
                  %v399 = vld [vmem:[%s375 + $0x4c] sm:%s368]
                  %400 = vst [vmem:[%s376 + $0x2c] sm:%s368] %v399
                  %v401 = vld [vmem:[%s375 + $0x60] sm:%s368]
                  %402 = vst [vmem:[%s376 + $0x30] sm:%s368] %v401
                  %v403 = vld [vmem:[%s375 + $0x64] sm:%s368]
                  %404 = vst [vmem:[%s376 + $0x34] sm:%s368] %v403
                  %v405 = vld [vmem:[%s375 + $0x68] sm:%s368]
                  %406 = vst [vmem:[%s376 + $0x38] sm:%s368] %v405
                  %v407 = vld [vmem:[%s375 + $0x6c] sm:%s368]
                  %408 = vst [vmem:[%s376 + $0x3c] sm:%s368] %v407
                  %v409 = vld [vmem:[%s375 + $0x80] sm:%s368]
                  %410 = vst [vmem:[%s376 + $0x40] sm:%s368] %v409
                  %v411 = vld [vmem:[%s375 + $0x84] sm:%s368]
                  %412 = vst [vmem:[%s376 + $0x44] sm:%s368] %v411
                  %v413 = vld [vmem:[%s375 + $0x88] sm:%s368]
                  %414 = vst [vmem:[%s376 + $0x48] sm:%s368] %v413
                  %v415 = vld [vmem:[%s375 + $0x8c] sm:%s368]
                  %416 = vst [vmem:[%s376 + $0x4c] sm:%s368] %v415
                  %v417 = vld [vmem:[%s375 + $0xa0] sm:%s368]
                  %418 = vst [vmem:[%s376 + $0x50] sm:%s368] %v417
                  %v419 = vld [vmem:[%s375 + $0xa4] sm:%s368]
                  %420 = vst [vmem:[%s376 + $0x54] sm:%s368] %v419
                  %v421 = vld [vmem:[%s375 + $0xa8] sm:%s368]
                  %422 = vst [vmem:[%s376 + $0x58] sm:%s368] %v421
                  %v423 = vld [vmem:[%s375 + $0xac] sm:%s368]
                  %424 = vst [vmem:[%s376 + $0x5c] sm:%s368] %v423
                  %v425 = vld [vmem:[%s375 + $0xc0] sm:%s368]
                  %426 = vst [vmem:[%s376 + $0x60] sm:%s368] %v425
                  %v427 = vld [vmem:[%s375 + $0xc4] sm:%s368]
                  %428 = vst [vmem:[%s376 + $0x64] sm:%s368] %v427
                  %v429 = vld [vmem:[%s375 + $0xc8] sm:%s368]
                  %430 = vst [vmem:[%s376 + $0x68] sm:%s368] %v429
                  %v431 = vld [vmem:[%s375 + $0xcc] sm:%s368]
                  %432 = vst [vmem:[%s376 + $0x6c] sm:%s368] %v431
                  %v433 = vld [vmem:[%s375 + $0xe0] sm:%s368]
                  %434 = vst [vmem:[%s376 + $0x70] sm:%s368] %v433
                  %v435 = vld [vmem:[%s375 + $0xe4] sm:%s368]
                  %436 = vst [vmem:[%s376 + $0x74] sm:%s368] %v435
                  %v437 = vld [vmem:[%s375 + $0xe8] sm:%s368]
                  %438 = vst [vmem:[%s376 + $0x78] sm:%s368] %v437
                  %v439 = vld [vmem:[%s375 + $0xec] sm:%s368]
                  %440 = vst [vmem:[%s376 + $0x7c] sm:%s368] %v439
                $region67: #{egt_layer_forward.1} parent=54 // loop_footer
                  %s374 = sadd.s32 1, %s370
                $region68: #{egt_layer_forward.1} parent=54 // loop_footer_branch
                  %369 = sbr.rel target = $region64
                $region69: #{egt_layer_forward.1} parent=54 // loop_exit
                  _
              $region55: #{egt_layer_forward.1} parent=39 // pred_fallthru
                _
            $region40: #{egt_layer_forward.1} parent=35 // pred_fallthru
              _
            // Predicated region
            $region41: #{egt_layer_forward.1} parent=35 // pred_check
              _
            $region42: #{egt_layer_forward.1} parent=35 // pred_check_branch
              %282 = sbr.rel (0) target = $region44
            $region43: #{egt_layer_forward.1} parent=35 // pred_region
              %s284 = ssub.s32 16, 1
              loop: start=0, step=1, limit=1
              $region45: #{egt_layer_forward.1} parent=43 // loop_pre_header
                _
              $region46: #{egt_layer_forward.1} parent=43 // loop_header
                %s286 = sphi 0, %s290
                %p287 = scmp.ge.s32.totalorder %s286, 1
                %s291 = sphi %s276, %s276
                %s292 = sphi %s271, %s271
              $region47: #{egt_layer_forward.1} parent=43 // loop_header_branch
                %289 = sbr.rel (%p287) target = $region51
              $region48: #{egt_layer_forward.1} parent=43 // loop_body
                %v293 = vld [vmem:[%s291] sm:%s284]
                %294 = vst [vmem:[%s292] sm:%s284] %v293
                %v295 = vld [vmem:[%s291 + $0x4] sm:%s284]
                %296 = vst [vmem:[%s292 + $0x4] sm:%s284] %v295
                %v297 = vld [vmem:[%s291 + $0x8] sm:%s284]
                %298 = vst [vmem:[%s292 + $0x8] sm:%s284] %v297
                %v299 = vld [vmem:[%s291 + $0xc] sm:%s284]
                %300 = vst [vmem:[%s292 + $0xc] sm:%s284] %v299
                %v301 = vld [vmem:[%s291 + $0x20] sm:%s284]
                %302 = vst [vmem:[%s292 + $0x10] sm:%s284] %v301
                %v303 = vld [vmem:[%s291 + $0x24] sm:%s284]
                %304 = vst [vmem:[%s292 + $0x14] sm:%s284] %v303
                %v305 = vld [vmem:[%s291 + $0x28] sm:%s284]
                %306 = vst [vmem:[%s292 + $0x18] sm:%s284] %v305
                %v307 = vld [vmem:[%s291 + $0x2c] sm:%s284]
                %308 = vst [vmem:[%s292 + $0x1c] sm:%s284] %v307
                %v309 = vld [vmem:[%s291 + $0x40] sm:%s284]
                %310 = vst [vmem:[%s292 + $0x20] sm:%s284] %v309
                %v311 = vld [vmem:[%s291 + $0x44] sm:%s284]
                %312 = vst [vmem:[%s292 + $0x24] sm:%s284] %v311
                %v313 = vld [vmem:[%s291 + $0x48] sm:%s284]
                %314 = vst [vmem:[%s292 + $0x28] sm:%s284] %v313
                %v315 = vld [vmem:[%s291 + $0x4c] sm:%s284]
                %316 = vst [vmem:[%s292 + $0x2c] sm:%s284] %v315
                %v317 = vld [vmem:[%s291 + $0x60] sm:%s284]
                %318 = vst [vmem:[%s292 + $0x30] sm:%s284] %v317
                %v319 = vld [vmem:[%s291 + $0x64] sm:%s284]
                %320 = vst [vmem:[%s292 + $0x34] sm:%s284] %v319
                %v321 = vld [vmem:[%s291 + $0x68] sm:%s284]
                %322 = vst [vmem:[%s292 + $0x38] sm:%s284] %v321
                %v323 = vld [vmem:[%s291 + $0x6c] sm:%s284]
                %324 = vst [vmem:[%s292 + $0x3c] sm:%s284] %v323
                %v325 = vld [vmem:[%s291 + $0x80] sm:%s284]
                %326 = vst [vmem:[%s292 + $0x40] sm:%s284] %v325
                %v327 = vld [vmem:[%s291 + $0x84] sm:%s284]
                %328 = vst [vmem:[%s292 + $0x44] sm:%s284] %v327
                %v329 = vld [vmem:[%s291 + $0x88] sm:%s284]
                %330 = vst [vmem:[%s292 + $0x48] sm:%s284] %v329
                %v331 = vld [vmem:[%s291 + $0x8c] sm:%s284]
                %332 = vst [vmem:[%s292 + $0x4c] sm:%s284] %v331
                %v333 = vld [vmem:[%s291 + $0xa0] sm:%s284]
                %334 = vst [vmem:[%s292 + $0x50] sm:%s284] %v333
                %v335 = vld [vmem:[%s291 + $0xa4] sm:%s284]
                %336 = vst [vmem:[%s292 + $0x54] sm:%s284] %v335
                %v337 = vld [vmem:[%s291 + $0xa8] sm:%s284]
                %338 = vst [vmem:[%s292 + $0x58] sm:%s284] %v337
                %v339 = vld [vmem:[%s291 + $0xac] sm:%s284]
                %340 = vst [vmem:[%s292 + $0x5c] sm:%s284] %v339
                %v341 = vld [vmem:[%s291 + $0xc0] sm:%s284]
                %342 = vst [vmem:[%s292 + $0x60] sm:%s284] %v341
                %v343 = vld [vmem:[%s291 + $0xc4] sm:%s284]
                %344 = vst [vmem:[%s292 + $0x64] sm:%s284] %v343
                %v345 = vld [vmem:[%s291 + $0xc8] sm:%s284]
                %346 = vst [vmem:[%s292 + $0x68] sm:%s284] %v345
                %v347 = vld [vmem:[%s291 + $0xcc] sm:%s284]
                %348 = vst [vmem:[%s292 + $0x6c] sm:%s284] %v347
                %v349 = vld [vmem:[%s291 + $0xe0] sm:%s284]
                %350 = vst [vmem:[%s292 + $0x70] sm:%s284] %v349
                %v351 = vld [vmem:[%s291 + $0xe4] sm:%s284]
                %352 = vst [vmem:[%s292 + $0x74] sm:%s284] %v351
                %v353 = vld [vmem:[%s291 + $0xe8] sm:%s284]
                %354 = vst [vmem:[%s292 + $0x78] sm:%s284] %v353
                %v355 = vld [vmem:[%s291 + $0xec] sm:%s284]
                %356 = vst [vmem:[%s292 + $0x7c] sm:%s284] %v355
              $region49: #{egt_layer_forward.1} parent=43 // loop_footer
                %s290 = sadd.s32 1, %s286
              $region50: #{egt_layer_forward.1} parent=43 // loop_footer_branch
                %285 = sbr.rel target = $region46
              $region51: #{egt_layer_forward.1} parent=43 // loop_exit
                _
            $region44: #{egt_layer_forward.1} parent=35 // pred_fallthru
              _
          $region36: #{egt_layer_forward.1} parent=31 // pred_fallthru
            _
          %441 = vnop
        $region32: #{egt_layer_forward.1} parent=15 // pred_fallthru
          _
        // Predicated region
        $region70: #{egt_layer_forward.1} parent=15 // pred_check
          %p442 = pneg %p155
        $region71: #{egt_layer_forward.1} parent=15 // pred_check_branch
          %444 = sbr.rel (%p442) target = $region73
        $region72: #{egt_layer_forward.1} parent=15 // pred_region
          %s445 = smul.u32 4, %s21
          %p446 = scmp.lt.s32.totalorder %s20, 1
          %s447 = scalar_select %p446, %s20, 1
          %p448 = scmp.lt.s32.totalorder %s445, 3
          %s449 = scalar_select %p448, %s445, 3
          %s450 = smul.addr %s447, 4
          %s451 = sadd.s32 %s449, %s450
          %s452 = smul.addr %s451, 4
          %s453 = scalar_lea.vmem %s4, %s452
          %s454 = smul.u32 4, %s21
        $region73: #{egt_layer_forward.1} parent=15 // pred_fallthru
          _
      $region16: #{egt_layer_forward.1} parent=5 // pred_fallthru
        _
      %p455 = scmp.le.s32.totalorder 1, %s13
      %p456 = scmp.lt.s32.totalorder %s13, 3
      %p457 = pnand %p455, %p456
      %p458 = pneg %p457
      // Predicated region
      $region74: #{egt_layer_forward.1} parent=5 // pred_check
        _
      $region75: #{egt_layer_forward.1} parent=5 // pred_check_branch
        %460 = sbr.rel (%p457) target = $region77
      $region76: #{egt_layer_forward.1} parent=5 // pred_region
        %s461 = ssub.s32 %s13, 1
        %s462 = sand.u32 %s120, 1
        %s463 = sand.u32 %s120, 1
        %s464 = smul.addr %s463, 128
        %s465 = scalar_lea.vmem [#allocation2], %s464
        // Predicated region
        $region78: #{egt_layer_forward.1} parent=76 // pred_check
          %p466 = pneg %p133
        $region79: #{egt_layer_forward.1} parent=76 // pred_check_branch
          %468 = sbr.rel (%p466) target = $region81
        $region80: #{egt_layer_forward.1} parent=76 // pred_region
          _
        $region81: #{egt_layer_forward.1} parent=76 // pred_fallthru
          _
        %s469 = smul.u32 4, %s23
        %p470 = scmp.lt.s32.totalorder %s22, 1
        %s471 = scalar_select %p470, %s22, 1
        %p472 = scmp.lt.s32.totalorder %s469, 3
        %s473 = scalar_select %p472, %s469, 3
        %s474 = smul.addr %s471, 4
        %s475 = sadd.s32 %s473, %s474
        %s476 = smul.addr %s475, 4
        %s477 = scalar_lea.vmem %s0, %s476
        %p478 = pneg %p53
        %p479 = pneg %p50
        %p480 = scmp.lt.s32.totalorder %s22, 1
        %s481 = scalar_select %p480, %s22, 1
        %s482 = smul.addr %s481, 4
        %s483 = smul.addr %s482, 4
        %s484 = scalar_lea.vmem %s1, %s483
        %p485 = pneg %p79
        %p486 = pneg %p76
        %p487 = scmp.lt.s32.totalorder %s22, 1
        %s488 = scalar_select %p487, %s22, 1
        %s489 = smul.addr %s488, 4
        %s490 = smul.addr %s489, 4
        %s491 = scalar_lea.vmem %s2, %s490
        %p492 = pneg %p105
        %p493 = pneg %p102
        %s494 = sand.u32 %s120, 1
        %s495 = sand.u32 %s120, 1
        %s496 = smul.addr %s495, 128
        %s497 = scalar_lea.vmem [#allocation2], %s496
        %p498 = pneg %p133
        %p499 = pneg %p130
        %s500 = smul.u32 4, %s23
        %p501 = scmp.lt.s32.totalorder %s22, 1
        %s502 = scalar_select %p501, %s22, 1
        %p503 = scmp.lt.s32.totalorder %s500, 3
        %s504 = scalar_select %p503, %s500, 3
        %s505 = smul.addr %s502, 4
        %s506 = sadd.s32 %s504, %s505
        %s507 = smul.addr %s506, 4
        %s508 = scalar_lea.vmem %s4, %s507
        %p509 = pneg %p161
        %p510 = pneg %p158
        %p511 = pneg %p189
        %p512 = pneg %p186
        %s513 = smul.u32 4, %s23
        %p514 = scmp.lt.s32.totalorder %s22, 1
        %s515 = scalar_select %p514, %s22, 1
        %p516 = scmp.lt.s32.totalorder %s513, 3
        %s517 = scalar_select %p516, %s513, 3
        %s518 = smul.addr %s515, 4
        %s519 = sadd.s32 %s517, %s518
        %s520 = smul.addr %s519, 8
        %s521 = scalar_lea.vmem %s5, %s520
        %p522 = pneg %p217
        %p523 = pneg %p214
        %s524 = smul.u32 4, %s23
        %p525 = scmp.lt.s32.totalorder %s22, 1
        %s526 = scalar_select %p525, %s22, 1
        %p527 = scmp.lt.s32.totalorder %s524, 3
        %s528 = scalar_select %p527, %s524, 3
        %s529 = smul.addr %s526, 16
        %s530 = sadd.s32 %s528, %s529
        %s531 = smul.addr %s530, 4
        %s532 = scalar_lea.vmem %s6, %s531
        %s533 = smul.u32 4, %s23
        %p534 = scmp.lt.s32.totalorder %s22, 1
        %s535 = scalar_select %p534, %s22, 1
        %p536 = scmp.lt.s32.totalorder %s533, 3
        %s537 = scalar_select %p536, %s533, 3
        %s538 = smul.addr %s535, 4
        %s539 = sadd.s32 %s537, %s538
        %s540 = smul.addr %s539, 4
        %s541 = scalar_lea.vmem %s0, %s540
        %s542 = smul.u32 4, %s23
        %p543 = scmp.lt.s32.totalorder %s22, 1
        %s544 = scalar_select %p543, %s22, 1
        %s545 = smul.addr %s544, 4
        %s546 = smul.addr %s545, 4
        %s547 = scalar_lea.vmem %s1, %s546
        %p548 = scmp.lt.s32.totalorder %s22, 1
        %s549 = scalar_select %p548, %s22, 1
        %s550 = smul.addr %s549, 4
        %s551 = smul.addr %s550, 4
        %s552 = scalar_lea.vmem %s2, %s551
        %s553 = smul.u32 4, %s23
        %s554 = smul.u32 4, %s23
        %p555 = scmp.lt.s32.totalorder %s22, 1
        %s556 = scalar_select %p555, %s22, 1
        %p557 = scmp.lt.s32.totalorder %s554, 3
        %s558 = scalar_select %p557, %s554, 3
        %s559 = smul.addr %s556, 4
        %s560 = sadd.s32 %s558, %s559
        %s561 = smul.addr %s560, 4
        %s562 = scalar_lea.vmem %s4, %s561
        %s563 = smul.u32 4, %s23
        %s564 = smul.u32 4, %s23
        %p565 = scmp.lt.s32.totalorder %s22, 1
        %s566 = scalar_select %p565, %s22, 1
        %p567 = scmp.lt.s32.totalorder %s564, 3
        %s568 = scalar_select %p567, %s564, 3
        %s569 = smul.addr %s566, 4
        %s570 = sadd.s32 %s568, %s569
        %s571 = smul.addr %s570, 8
        %s572 = scalar_lea.vmem %s5, %s571
        %s573 = smul.u32 4, %s23
        %s574 = smul.u32 4, %s23
        %p575 = scmp.lt.s32.totalorder %s22, 1
        %s576 = scalar_select %p575, %s22, 1
        %p577 = scmp.lt.s32.totalorder %s574, 3
        %s578 = scalar_select %p577, %s574, 3
        %s579 = smul.addr %s576, 16
        %s580 = sadd.s32 %s578, %s579
        %s581 = smul.addr %s580, 4
        %s582 = scalar_lea.vmem %s6, %s581
        %s583 = smul.u32 4, %s23
        %v585 = vld [vmem:[%s541] sm:$0xf]
        %v586 = vld [vmem:[%s541 + $0x4] sm:$0xf]
        %v587 = vld [vmem:[%s541 + $0x8] sm:$0xf]
        %v588 = vld [vmem:[%s541 + $0xc] sm:$0xf]
        %v589 = vld [vmem:[%s547] sm:$0xf]
        %v590 = vld [vmem:[%s547 + $0x4] sm:$0xf]
        %v591 = vld [vmem:[%s547 + $0x8] sm:$0xf]
        %v592 = vld [vmem:[%s547 + $0xc] sm:$0xf]
        %v593 = vld [vmem:[%s552] sm:$0xf]
        %v594 = vld [vmem:[%s552 + $0x4] sm:$0xf]
        %v595 = vld [vmem:[%s552 + $0x8] sm:$0xf]
        %v596 = vld [vmem:[%s552 + $0xc] sm:$0xf]
        %v597 = vld [vmem:[%s562] sm:$0xf]
        %v598 = vld [vmem:[%s562 + $0x4] sm:$0xf]
        %v599 = vld [vmem:[%s562 + $0x8] sm:$0xf]
        %v600 = vld [vmem:[%s562 + $0xc] sm:$0xf]
        %v601 = vunpack.c.l.bf16 %v597
        %v602 = vunpack.c.l.bf16 %v598
        %v603 = vunpack.c.l.bf16 %v599
        %v604 = vunpack.c.l.bf16 %v600
        %v609 = vunpack.c.l.b16 %v585
        %v610 = vunpack.c.l.b16 %v586
        %v611 = vunpack.c.l.b16 %v587
        %v612 = vunpack.c.l.b16 %v588
        %v613 = vpack.c.b16 %v610, %v609
        %v614 = vpack.c.b16 %v612, %v611
        %v619 = vunpack.c.l.b16 %v589
        %v620 = vunpack.c.l.b16 %v590
        %v621 = vunpack.c.l.b16 %v591
        %v622 = vunpack.c.l.b16 %v592
        %v623 = vpack.c.b16 %v620, %v619
        %v624 = vpack.c.b16 %v622, %v621
        %vm625 = vcmask 64512
        %v627 = vsel %vm625, %v613, 0
        %v630 = vsel %vm625, %v614, 0
        %v633 = vsel %vm625, %v623, 0
        %v636 = vsel %vm625, %v624, 0
        %638 = vmatprep.subr.bf16.mxu0 0
        %639 = vmatpush1.bf16.xpose.msra.mxu0 0
        %640 = vmatprep.subr.bf16.mxu0 0
        %641 = vmatpush1.bf16.xpose.msra.mxu0 0
        %642 = vmatprep.subr.bf16.mxu0 0
        %643 = vmatpush1.bf16.xpose.msra.mxu0 0
        %644 = vmatprep.subr.bf16.mxu0 0
        %645 = vmatpush1.bf16.xpose.msra.mxu0 0
        %646 = vmatprep.subr.bf16.mxu0 0
        %647 = vmatpush1.bf16.xpose.msra.mxu0 0
        %648 = vmatprep.subr.bf16.mxu0 0
        %649 = vmatpush1.bf16.xpose.msra.mxu0 0
        %650 = vmatprep.subr.bf16.mxu0 0
        %651 = vmatpush1.bf16.xpose.msra.mxu0 %v636
        %652 = vmatprep.subr.bf16.mxu0 0
        %653 = vmatpush1.bf16.xpose.msra.mxu0 %v633
        %654 = vmatprep.subr.bf16.mxu0 0
        %655 = vmatpush2.bf16.xpose.msra.mxu0 0
        %656 = vmatprep.subr.bf16.mxu0 0
        %657 = vmatpush2.bf16.xpose.msra.mxu0 0
        %658 = vmatprep.subr.bf16.mxu0 0
        %659 = vmatpush2.bf16.xpose.msra.mxu0 0
        %660 = vmatprep.subr.bf16.mxu0 0
        %661 = vmatpush2.bf16.xpose.msra.mxu0 0
        %662 = vmatprep.subr.bf16.mxu0 0
        %663 = vmatpush2.bf16.xpose.msra.mxu0 0
        %664 = vmatprep.subr.bf16.mxu0 0
        %665 = vmatpush2.bf16.xpose.msra.mxu0 0
        %666 = vmatprep.subr.bf16.mxu0 0
        %667 = vmatpush2.bf16.xpose.msra.mxu0 0
        %668 = vmatprep.subr.bf16.mxu0 0
        %669 = vmatpush2.bf16.xpose.msra.mxu0 0
        %670 = vmatprep.mubr.bf16.mxu0 0
        %671 = vmatmul.mubr.bf16.gmra.mxu0 %v627
        %v672 = vpop.f32.mrf.mxu0
        %v673 = vadd.f32 0.0, %v672
        %v674 = vpop.f32.mrf.mxu0
        %v675 = vpop.f32.mrf.mxu0
        %v676 = vadd.f32 0.0, %v675
        %v677 = vpop.f32.mrf.mxu0
        %678 = vmatprep.mubr.bf16.mxu0 0
        %679 = vmatmul.mubr.bf16.gmra.mxu0 %v630
        %v680 = vpop.f32.mrf.mxu0
        %v681 = vadd.f32 0.0, %v680
        %v682 = vpop.f32.mrf.mxu0
        %v683 = vpop.f32.mrf.mxu0
        %v684 = vadd.f32 0.0, %v683
        %v685 = vpop.f32.mrf.mxu0
        %686 = vdwg.mxu0
        %v687 = vld [vmem:[%s465] sm:$0xf]
        %v688 = vld [vmem:[%s465 + $0x4] sm:$0xf]
        %v689 = vld [vmem:[%s465 + $0x8] sm:$0xf]
        %v690 = vld [vmem:[%s465 + $0xc] sm:$0xf]
        %v691 = vunpack.c.l.bf16 %v687
        %v692 = vunpack.c.l.bf16 %v688
        %v693 = vunpack.c.l.bf16 %v689
        %v694 = vunpack.c.l.bf16 %v690
        %v695 = vmax.f32 %v673, -5.0
        %v696 = vmax.f32 %v676, -5.0
        %v697 = vmax.f32 %v681, -5.0
        %v698 = vmax.f32 %v684, -5.0
        %v699 = vmin.f32 %v695, 5.0
        %v700 = vmin.f32 %v696, 5.0
        %v701 = vmin.f32 %v697, 5.0
        %v702 = vmin.f32 %v698, 5.0
        %v703 = vadd.f32 %v699, %v691
        %v704 = vadd.f32 %v700, %v692
        %v705 = vadd.f32 %v701, %v693
        %v706 = vadd.f32 %v702, %v694
        %v707 = vpack.c.bf16 %v704, %v703
        %v708 = vpack.c.bf16 %v706, %v705
        %v711 = vunpack.c.l.b16 %v707
        %v712 = vunpack.c.h.b16 %v707
        %v713 = vunpack.c.l.b16 %v708
        %v714 = vunpack.c.h.b16 %v708
        %v715 = vpack.c.b16 %v711, %v711
        %v716 = vpack.c.b16 %v712, %v712
        %v717 = vpack.c.b16 %v713, %v713
        %v718 = vpack.c.b16 %v714, %v714
        %vm723 = vcmask 257024
        %724 = vst.msk [vmem:[%s582] sm:$0xf] %vm723, %v715
        %725 = vst.msk [vmem:[%s582 + $0x4] sm:$0xf] %vm723, %v716
        %726 = vst.msk [vmem:[%s582 + $0x8] sm:$0xf] %vm723, %v717
        %727 = vst.msk [vmem:[%s582 + $0xc] sm:$0xf] %vm723, %v718
        %s728 = scalar_lea.vmem %s465, 64 [#allocation2]
        %v729 = vld [vmem:[%s728] sm:$0xf]
        %v730 = vld [vmem:[%s728 + $0x4] sm:$0xf]
        %v731 = vld [vmem:[%s728 + $0x8] sm:$0xf]
        %v732 = vld [vmem:[%s728 + $0xc] sm:$0xf]
        %v733 = vunpack.c.l.bf16 %v729
        %v734 = vunpack.c.l.bf16 %v730
        %v735 = vunpack.c.l.bf16 %v731
        %v736 = vunpack.c.l.bf16 %v732
        %v737 = vadd.f32 %v703, %v601
        %v738 = vadd.f32 %v704, %v602
        %v739 = vadd.f32 %v705, %v603
        %v740 = vadd.f32 %v706, %v604
        %v741 = vadd.f32 %v733, %v601
        %v742 = vadd.f32 %v734, %v602
        %v743 = vadd.f32 %v735, %v603
        %v744 = vadd.f32 %v736, %v604
        %v745 = vxor.u32 %v741, 2147483648
        %v746 = vxor.u32 %v742, 2147483648
        %v747 = vxor.u32 %v743, 2147483648
        %v748 = vxor.u32 %v744, 2147483648
        %v749 = vmul.f32 %v745, 1.442695
        %v750 = vpow.pop %v749
        %v751 = vmul.f32 %v746, 1.442695
        %v752 = vpow.pop %v751
        %v753 = vmul.f32 %v747, 1.442695
        %v754 = vpow.pop %v753
        %v755 = vmul.f32 %v748, 1.442695
        %v756 = vpow.pop %v755
        %v757 = vadd.f32 %v750, 1.0
        %v758 = vadd.f32 %v752, 1.0
        %v759 = vadd.f32 %v754, 1.0
        %v760 = vadd.f32 %v756, 1.0
        %v761 = vrcp.pop %v757
        %v762 = vmul.f32 1.0, %v761
        %v763 = vrcp.pop %v758
        %v764 = vmul.f32 1.0, %v763
        %v765 = vrcp.pop %v759
        %v766 = vmul.f32 1.0, %v765
        %v767 = vrcp.pop %v760
        %v768 = vmul.f32 1.0, %v767
        %vm769 = vcmask 261120
        %v770 = vsel %vm769, %v737, -inf
        %771 = vmax.xlane.f32.xlu0 %v770
        %v772 = vpop.xlane.xlu0 %771
        %v773 = vsel %vm769, %v738, -inf
        %774 = vmax.xlane.f32.xlu0 %v773
        %v775 = vpop.xlane.xlu0 %774
        %v776 = vsel %vm769, %v739, -inf
        %777 = vmax.xlane.f32.xlu0 %v776
        %v778 = vpop.xlane.xlu0 %777
        %v779 = vsel %vm769, %v740, -inf
        %780 = vmax.xlane.f32.xlu0 %v779
        %v781 = vpop.xlane.xlu0 %780
        %v782 = vsub.f32 %v737, %v772
        %v783 = vsub.f32 %v738, %v775
        %v784 = vsub.f32 %v739, %v778
        %v785 = vsub.f32 %v740, %v781
        %v786 = vmul.f32 %v782, 1.442695
        %v787 = vpow.pop %v786
        %v788 = vmul.f32 %v783, 1.442695
        %v789 = vpow.pop %v788
        %v790 = vmul.f32 %v784, 1.442695
        %v791 = vpow.pop %v790
        %v792 = vmul.f32 %v785, 1.442695
        %v793 = vpow.pop %v792
        %v794 = vsel %vm769, %v787, 0.0
        %795 = vadd.xlane.f32.xlu0 %v794
        %v796 = vpop.xlane.xlu0 %795
        %v797 = vsel %vm769, %v789, 0.0
        %798 = vadd.xlane.f32.xlu0 %v797
        %v799 = vpop.xlane.xlu0 %798
        %v800 = vsel %vm769, %v791, 0.0
        %801 = vadd.xlane.f32.xlu0 %v800
        %v802 = vpop.xlane.xlu0 %801
        %v803 = vsel %vm769, %v793, 0.0
        %804 = vadd.xlane.f32.xlu0 %v803
        %v805 = vpop.xlane.xlu0 %804
        %v806 = vrcp.pop %v796
        %v807 = vrcp.pop %v799
        %v808 = vrcp.pop %v802
        %v809 = vrcp.pop %v805
        %v810 = vmul.f32 %v787, %v806
        %v811 = vmul.f32 %v789, %v807
        %v812 = vmul.f32 %v791, %v808
        %v813 = vmul.f32 %v793, %v809
        %v814 = vmul.f32 %v810, %v762
        %v815 = vmul.f32 %v811, %v764
        %v816 = vmul.f32 %v812, %v766
        %v817 = vmul.f32 %v813, %v768
        %v818 = vpack.c.bf16 %v815, %v814
        %v819 = vpack.c.bf16 %v817, %v816
        %v824 = vunpack.c.l.b16 %v593
        %v825 = vunpack.c.l.b16 %v594
        %v826 = vunpack.c.l.b16 %v595
        %v827 = vunpack.c.l.b16 %v596
        %v828 = vpack.c.b16 %v825, %v824
        %v829 = vpack.c.b16 %v827, %v826
        %v833 = vsel %vm769, %v818, 0
        %v836 = vsel %vm769, %v819, 0
        %838 = vmatprep.subr.bf16.mxu0 0
        %839 = vmatpush1.bf16.msra.mxu0 0
        %840 = vmatprep.subr.bf16.mxu0 0
        %841 = vmatpush1.bf16.msra.mxu0 0
        %842 = vmatprep.subr.bf16.mxu0 0
        %843 = vmatpush1.bf16.msra.mxu0 0
        %844 = vmatprep.subr.bf16.mxu0 0
        %845 = vmatpush1.bf16.msra.mxu0 0
        %846 = vmatprep.subr.bf16.mxu0 0
        %847 = vmatpush1.bf16.msra.mxu0 0
        %848 = vmatprep.subr.bf16.mxu0 0
        %849 = vmatpush1.bf16.msra.mxu0 0
        %850 = vmatprep.subr.bf16.mxu0 0
        %851 = vmatpush1.bf16.msra.mxu0 %v829
        %852 = vmatprep.subr.bf16.mxu0 0
        %853 = vmatpush1.bf16.msra.mxu0 %v828
        %854 = vmatprep.subr.bf16.mxu0 0
        %855 = vmatpush2.bf16.msra.mxu0 0
        %856 = vmatprep.subr.bf16.mxu0 0
        %857 = vmatpush2.bf16.msra.mxu0 0
        %858 = vmatprep.subr.bf16.mxu0 0
        %859 = vmatpush2.bf16.msra.mxu0 0
        %860 = vmatprep.subr.bf16.mxu0 0
        %861 = vmatpush2.bf16.msra.mxu0 0
        %862 = vmatprep.subr.bf16.mxu0 0
        %863 = vmatpush2.bf16.msra.mxu0 0
        %864 = vmatprep.subr.bf16.mxu0 0
        %865 = vmatpush2.bf16.msra.mxu0 0
        %866 = vmatprep.subr.bf16.mxu0 0
        %867 = vmatpush2.bf16.msra.mxu0 0
        %868 = vmatprep.subr.bf16.mxu0 0
        %869 = vmatpush2.bf16.msra.mxu0 0
        %870 = vmatprep.mubr.bf16.mxu0 0
        %871 = vmatmul.mubr.bf16.gmra.mxu0 %v833
        %v872 = vpop.f32.mrf.mxu0
        %v873 = vadd.f32 0.0, %v872
        %v874 = vpop.f32.mrf.mxu0
        %v875 = vpop.f32.mrf.mxu0
        %v876 = vadd.f32 0.0, %v875
        %v877 = vpop.f32.mrf.mxu0
        %878 = vmatprep.mubr.bf16.mxu0 0
        %879 = vmatmul.mubr.bf16.gmra.mxu0 %v836
        %v880 = vpop.f32.mrf.mxu0
        %v881 = vadd.f32 0.0, %v880
        %v882 = vpop.f32.mrf.mxu0
        %v883 = vpop.f32.mrf.mxu0
        %v884 = vadd.f32 0.0, %v883
        %v885 = vpop.f32.mrf.mxu0
        %886 = vdwg.mxu0
        %887 = vrot.lane.b32.xlu0 %v613, 120
        %v888 = vpop.permute.xlu0 %887
        %889 = vrot.lane.b32.xlu0 %v614, 120
        %v890 = vpop.permute.xlu0 %889
        %891 = vrot.lane.b32.xlu0 %v623, 120
        %v892 = vpop.permute.xlu0 %891
        %893 = vrot.lane.b32.xlu0 %v624, 120
        %v894 = vpop.permute.xlu0 %893
        %v896 = vsel %vm625, %v888, 0
        %v899 = vsel %vm625, %v890, 0
        %v902 = vsel %vm625, %v892, 0
        %v905 = vsel %vm625, %v894, 0
        %907 = vmatprep.subr.bf16.mxu0 0
        %908 = vmatpush1.bf16.xpose.msra.mxu0 0
        %909 = vmatprep.subr.bf16.mxu0 0
        %910 = vmatpush1.bf16.xpose.msra.mxu0 0
        %911 = vmatprep.subr.bf16.mxu0 0
        %912 = vmatpush1.bf16.xpose.msra.mxu0 0
        %913 = vmatprep.subr.bf16.mxu0 0
        %914 = vmatpush1.bf16.xpose.msra.mxu0 0
        %915 = vmatprep.subr.bf16.mxu0 0
        %916 = vmatpush1.bf16.xpose.msra.mxu0 0
        %917 = vmatprep.subr.bf16.mxu0 0
        %918 = vmatpush1.bf16.xpose.msra.mxu0 0
        %919 = vmatprep.subr.bf16.mxu0 0
        %920 = vmatpush1.bf16.xpose.msra.mxu0 %v905
        %921 = vmatprep.subr.bf16.mxu0 0
        %922 = vmatpush1.bf16.xpose.msra.mxu0 %v902
        %923 = vmatprep.subr.bf16.mxu0 0
        %924 = vmatpush2.bf16.xpose.msra.mxu0 0
        %925 = vmatprep.subr.bf16.mxu0 0
        %926 = vmatpush2.bf16.xpose.msra.mxu0 0
        %927 = vmatprep.subr.bf16.mxu0 0
        %928 = vmatpush2.bf16.xpose.msra.mxu0 0
        %929 = vmatprep.subr.bf16.mxu0 0
        %930 = vmatpush2.bf16.xpose.msra.mxu0 0
        %931 = vmatprep.subr.bf16.mxu0 0
        %932 = vmatpush2.bf16.xpose.msra.mxu0 0
        %933 = vmatprep.subr.bf16.mxu0 0
        %934 = vmatpush2.bf16.xpose.msra.mxu0 0
        %935 = vmatprep.subr.bf16.mxu0 0
        %936 = vmatpush2.bf16.xpose.msra.mxu0 0
        %937 = vmatprep.subr.bf16.mxu0 0
        %938 = vmatpush2.bf16.xpose.msra.mxu0 0
        %939 = vmatprep.mubr.bf16.mxu0 0
        %940 = vmatmul.mubr.bf16.gmra.mxu0 %v896
        %v941 = vpop.f32.mrf.mxu0
        %v942 = vadd.f32 0.0, %v941
        %v943 = vpop.f32.mrf.mxu0
        %v944 = vpop.f32.mrf.mxu0
        %v945 = vadd.f32 0.0, %v944
        %v946 = vpop.f32.mrf.mxu0
        %947 = vmatprep.mubr.bf16.mxu0 0
        %948 = vmatmul.mubr.bf16.gmra.mxu0 %v899
        %v949 = vpop.f32.mrf.mxu0
        %v950 = vadd.f32 0.0, %v949
        %v951 = vpop.f32.mrf.mxu0
        %v952 = vpop.f32.mrf.mxu0
        %v953 = vadd.f32 0.0, %v952
        %v954 = vpop.f32.mrf.mxu0
        %955 = vdwg.mxu0
        %s956 = scalar_lea.vmem %s465, 16 [#allocation2]
        %v957 = vld [vmem:[%s956] sm:$0xf]
        %v958 = vld [vmem:[%s956 + $0x4] sm:$0xf]
        %v959 = vld [vmem:[%s956 + $0x8] sm:$0xf]
        %v960 = vld [vmem:[%s956 + $0xc] sm:$0xf]
        %v961 = vunpack.c.l.bf16 %v957
        %v962 = vunpack.c.l.bf16 %v958
        %v963 = vunpack.c.l.bf16 %v959
        %v964 = vunpack.c.l.bf16 %v960
        %v965 = vmax.f32 %v942, -5.0
        %v966 = vmax.f32 %v945, -5.0
        %v967 = vmax.f32 %v950, -5.0
        %v968 = vmax.f32 %v953, -5.0
        %v969 = vmin.f32 %v965, 5.0
        %v970 = vmin.f32 %v966, 5.0
        %v971 = vmin.f32 %v967, 5.0
        %v972 = vmin.f32 %v968, 5.0
        %v973 = vadd.f32 %v969, %v961
        %v974 = vadd.f32 %v970, %v962
        %v975 = vadd.f32 %v971, %v963
        %v976 = vadd.f32 %v972, %v964
        %v977 = vpack.c.bf16 %v974, %v973
        %v978 = vpack.c.bf16 %v976, %v975
        %v981 = vunpack.c.l.b16 %v977
        %v982 = vunpack.c.h.b16 %v977
        %v983 = vunpack.c.l.b16 %v978
        %v984 = vunpack.c.h.b16 %v978
        %v985 = vpack.c.b16 %v981, %v981
        %v986 = vpack.c.b16 %v982, %v982
        %v987 = vpack.c.b16 %v983, %v983
        %v988 = vpack.c.b16 %v984, %v984
        %s993 = scalar_lea.vmem %s582, 16
        %994 = vst.msk [vmem:[%s993] sm:$0xf] %vm723, %v985
        %995 = vst.msk [vmem:[%s993 + $0x4] sm:$0xf] %vm723, %v986
        %996 = vst.msk [vmem:[%s993 + $0x8] sm:$0xf] %vm723, %v987
        %997 = vst.msk [vmem:[%s993 + $0xc] sm:$0xf] %vm723, %v988
        %s998 = scalar_lea.vmem %s465, 80 [#allocation2]
        %v999 = vld [vmem:[%s998] sm:$0xf]
        %v1000 = vld [vmem:[%s998 + $0x4] sm:$0xf]
        %v1001 = vld [vmem:[%s998 + $0x8] sm:$0xf]
        %v1002 = vld [vmem:[%s998 + $0xc] sm:$0xf]
        %v1003 = vunpack.c.l.bf16 %v999
        %v1004 = vunpack.c.l.bf16 %v1000
        %v1005 = vunpack.c.l.bf16 %v1001
        %v1006 = vunpack.c.l.bf16 %v1002
        %v1007 = vadd.f32 %v973, %v601
        %v1008 = vadd.f32 %v974, %v602
        %v1009 = vadd.f32 %v975, %v603
        %v1010 = vadd.f32 %v976, %v604
        %v1011 = vadd.f32 %v1003, %v601
        %v1012 = vadd.f32 %v1004, %v602
        %v1013 = vadd.f32 %v1005, %v603
        %v1014 = vadd.f32 %v1006, %v604
        %v1015 = vxor.u32 %v1011, 2147483648
        %v1016 = vxor.u32 %v1012, 2147483648
        %v1017 = vxor.u32 %v1013, 2147483648
        %v1018 = vxor.u32 %v1014, 2147483648
        %v1019 = vmul.f32 %v1015, 1.442695
        %v1020 = vpow.pop %v1019
        %v1021 = vmul.f32 %v1016, 1.442695
        %v1022 = vpow.pop %v1021
        %v1023 = vmul.f32 %v1017, 1.442695
        %v1024 = vpow.pop %v1023
        %v1025 = vmul.f32 %v1018, 1.442695
        %v1026 = vpow.pop %v1025
        %v1027 = vadd.f32 %v1020, 1.0
        %v1028 = vadd.f32 %v1022, 1.0
        %v1029 = vadd.f32 %v1024, 1.0
        %v1030 = vadd.f32 %v1026, 1.0
        %v1031 = vrcp.pop %v1027
        %v1032 = vmul.f32 1.0, %v1031
        %v1033 = vrcp.pop %v1028
        %v1034 = vmul.f32 1.0, %v1033
        %v1035 = vrcp.pop %v1029
        %v1036 = vmul.f32 1.0, %v1035
        %v1037 = vrcp.pop %v1030
        %v1038 = vmul.f32 1.0, %v1037
        %v1039 = vsel %vm769, %v1007, -inf
        %1040 = vmax.xlane.f32.xlu0 %v1039
        %v1041 = vpop.xlane.xlu0 %1040
        %v1042 = vsel %vm769, %v1008, -inf
        %1043 = vmax.xlane.f32.xlu0 %v1042
        %v1044 = vpop.xlane.xlu0 %1043
        %v1045 = vsel %vm769, %v1009, -inf
        %1046 = vmax.xlane.f32.xlu0 %v1045
        %v1047 = vpop.xlane.xlu0 %1046
        %v1048 = vsel %vm769, %v1010, -inf
        %1049 = vmax.xlane.f32.xlu0 %v1048
        %v1050 = vpop.xlane.xlu0 %1049
        %v1051 = vsub.f32 %v1007, %v1041
        %v1052 = vsub.f32 %v1008, %v1044
        %v1053 = vsub.f32 %v1009, %v1047
        %v1054 = vsub.f32 %v1010, %v1050
        %v1055 = vmul.f32 %v1051, 1.442695
        %v1056 = vpow.pop %v1055
        %v1057 = vmul.f32 %v1052, 1.442695
        %v1058 = vpow.pop %v1057
        %v1059 = vmul.f32 %v1053, 1.442695
        %v1060 = vpow.pop %v1059
        %v1061 = vmul.f32 %v1054, 1.442695
        %v1062 = vpow.pop %v1061
        %v1063 = vsel %vm769, %v1056, 0.0
        %1064 = vadd.xlane.f32.xlu0 %v1063
        %v1065 = vpop.xlane.xlu0 %1064
        %v1066 = vsel %vm769, %v1058, 0.0
        %1067 = vadd.xlane.f32.xlu0 %v1066
        %v1068 = vpop.xlane.xlu0 %1067
        %v1069 = vsel %vm769, %v1060, 0.0
        %1070 = vadd.xlane.f32.xlu0 %v1069
        %v1071 = vpop.xlane.xlu0 %1070
        %v1072 = vsel %vm769, %v1062, 0.0
        %1073 = vadd.xlane.f32.xlu0 %v1072
        %v1074 = vpop.xlane.xlu0 %1073
        %v1075 = vrcp.pop %v1065
        %v1076 = vrcp.pop %v1068
        %v1077 = vrcp.pop %v1071
        %v1078 = vrcp.pop %v1074
        %v1079 = vmul.f32 %v1056, %v1075
        %v1080 = vmul.f32 %v1058, %v1076
        %v1081 = vmul.f32 %v1060, %v1077
        %v1082 = vmul.f32 %v1062, %v1078
        %v1083 = vmul.f32 %v1079, %v1032
        %v1084 = vmul.f32 %v1080, %v1034
        %v1085 = vmul.f32 %v1081, %v1036
        %v1086 = vmul.f32 %v1082, %v1038
        %v1087 = vpack.c.bf16 %v1084, %v1083
        %v1088 = vpack.c.bf16 %v1086, %v1085
        %1089 = vrot.lane.b32.xlu0 %v828, 120
        %v1090 = vpop.permute.xlu0 %1089
        %1091 = vrot.lane.b32.xlu0 %v829, 120
        %v1092 = vpop.permute.xlu0 %1091
        %v1096 = vsel %vm769, %v1087, 0
        %v1099 = vsel %vm769, %v1088, 0
        %1101 = vmatprep.subr.bf16.mxu0 0
        %1102 = vmatpush1.bf16.msra.mxu0 0
        %1103 = vmatprep.subr.bf16.mxu0 0
        %1104 = vmatpush1.bf16.msra.mxu0 0
        %1105 = vmatprep.subr.bf16.mxu0 0
        %1106 = vmatpush1.bf16.msra.mxu0 0
        %1107 = vmatprep.subr.bf16.mxu0 0
        %1108 = vmatpush1.bf16.msra.mxu0 0
        %1109 = vmatprep.subr.bf16.mxu0 0
        %1110 = vmatpush1.bf16.msra.mxu0 0
        %1111 = vmatprep.subr.bf16.mxu0 0
        %1112 = vmatpush1.bf16.msra.mxu0 0
        %1113 = vmatprep.subr.bf16.mxu0 0
        %1114 = vmatpush1.bf16.msra.mxu0 %v1092
        %1115 = vmatprep.subr.bf16.mxu0 0
        %1116 = vmatpush1.bf16.msra.mxu0 %v1090
        %1117 = vmatprep.subr.bf16.mxu0 0
        %1118 = vmatpush2.bf16.msra.mxu0 0
        %1119 = vmatprep.subr.bf16.mxu0 0
        %1120 = vmatpush2.bf16.msra.mxu0 0
        %1121 = vmatprep.subr.bf16.mxu0 0
        %1122 = vmatpush2.bf16.msra.mxu0 0
        %1123 = vmatprep.subr.bf16.mxu0 0
        %1124 = vmatpush2.bf16.msra.mxu0 0
        %1125 = vmatprep.subr.bf16.mxu0 0
        %1126 = vmatpush2.bf16.msra.mxu0 0
        %1127 = vmatprep.subr.bf16.mxu0 0
        %1128 = vmatpush2.bf16.msra.mxu0 0
        %1129 = vmatprep.subr.bf16.mxu0 0
        %1130 = vmatpush2.bf16.msra.mxu0 0
        %1131 = vmatprep.subr.bf16.mxu0 0
        %1132 = vmatpush2.bf16.msra.mxu0 0
        %1133 = vmatprep.mubr.bf16.mxu0 0
        %1134 = vmatmul.mubr.bf16.gmra.mxu0 %v1096
        %v1135 = vpop.f32.mrf.mxu0
        %v1136 = vadd.f32 0.0, %v1135
        %v1137 = vpop.f32.mrf.mxu0
        %v1138 = vpop.f32.mrf.mxu0
        %v1139 = vadd.f32 0.0, %v1138
        %v1140 = vpop.f32.mrf.mxu0
        %1141 = vmatprep.mubr.bf16.mxu0 0
        %1142 = vmatmul.mubr.bf16.gmra.mxu0 %v1099
        %v1143 = vpop.f32.mrf.mxu0
        %v1144 = vadd.f32 0.0, %v1143
        %v1145 = vpop.f32.mrf.mxu0
        %v1146 = vpop.f32.mrf.mxu0
        %v1147 = vadd.f32 0.0, %v1146
        %v1148 = vpop.f32.mrf.mxu0
        %1149 = vdwg.mxu0
        %1150 = vrot.lane.b32.xlu0 %v613, 112
        %v1151 = vpop.permute.xlu0 %1150
        %1152 = vrot.lane.b32.xlu0 %v614, 112
        %v1153 = vpop.permute.xlu0 %1152
        %1154 = vrot.lane.b32.xlu0 %v623, 112
        %v1155 = vpop.permute.xlu0 %1154
        %1156 = vrot.lane.b32.xlu0 %v624, 112
        %v1157 = vpop.permute.xlu0 %1156
        %v1159 = vsel %vm625, %v1151, 0
        %v1162 = vsel %vm625, %v1153, 0
        %v1165 = vsel %vm625, %v1155, 0
        %v1168 = vsel %vm625, %v1157, 0
        %1170 = vmatprep.subr.bf16.mxu0 0
        %1171 = vmatpush1.bf16.xpose.msra.mxu0 0
        %1172 = vmatprep.subr.bf16.mxu0 0
        %1173 = vmatpush1.bf16.xpose.msra.mxu0 0
        %1174 = vmatprep.subr.bf16.mxu0 0
        %1175 = vmatpush1.bf16.xpose.msra.mxu0 0
        %1176 = vmatprep.subr.bf16.mxu0 0
        %1177 = vmatpush1.bf16.xpose.msra.mxu0 0
        %1178 = vmatprep.subr.bf16.mxu0 0
        %1179 = vmatpush1.bf16.xpose.msra.mxu0 0
        %1180 = vmatprep.subr.bf16.mxu0 0
        %1181 = vmatpush1.bf16.xpose.msra.mxu0 0
        %1182 = vmatprep.subr.bf16.mxu0 0
        %1183 = vmatpush1.bf16.xpose.msra.mxu0 %v1168
        %1184 = vmatprep.subr.bf16.mxu0 0
        %1185 = vmatpush1.bf16.xpose.msra.mxu0 %v1165
        %1186 = vmatprep.subr.bf16.mxu0 0
        %1187 = vmatpush2.bf16.xpose.msra.mxu0 0
        %1188 = vmatprep.subr.bf16.mxu0 0
        %1189 = vmatpush2.bf16.xpose.msra.mxu0 0
        %1190 = vmatprep.subr.bf16.mxu0 0
        %1191 = vmatpush2.bf16.xpose.msra.mxu0 0
        %1192 = vmatprep.subr.bf16.mxu0 0
        %1193 = vmatpush2.bf16.xpose.msra.mxu0 0
        %1194 = vmatprep.subr.bf16.mxu0 0
        %1195 = vmatpush2.bf16.xpose.msra.mxu0 0
        %1196 = vmatprep.subr.bf16.mxu0 0
        %1197 = vmatpush2.bf16.xpose.msra.mxu0 0
        %1198 = vmatprep.subr.bf16.mxu0 0
        %1199 = vmatpush2.bf16.xpose.msra.mxu0 0
        %1200 = vmatprep.subr.bf16.mxu0 0
        %1201 = vmatpush2.bf16.xpose.msra.mxu0 0
        %1202 = vmatprep.mubr.bf16.mxu0 0
        %1203 = vmatmul.mubr.bf16.gmra.mxu0 %v1159
        %v1204 = vpop.f32.mrf.mxu0
        %v1205 = vadd.f32 0.0, %v1204
        %v1206 = vpop.f32.mrf.mxu0
        %v1207 = vpop.f32.mrf.mxu0
        %v1208 = vadd.f32 0.0, %v1207
        %v1209 = vpop.f32.mrf.mxu0
        %1210 = vmatprep.mubr.bf16.mxu0 0
        %1211 = vmatmul.mubr.bf16.gmra.mxu0 %v1162
        %v1212 = vpop.f32.mrf.mxu0
        %v1213 = vadd.f32 0.0, %v1212
        %v1214 = vpop.f32.mrf.mxu0
        %v1215 = vpop.f32.mrf.mxu0
        %v1216 = vadd.f32 0.0, %v1215
        %v1217 = vpop.f32.mrf.mxu0
        %1218 = vdwg.mxu0
        %s1219 = scalar_lea.vmem %s465, 32 [#allocation2]
        %v1220 = vld [vmem:[%s1219] sm:$0xf]
        %v1221 = vld [vmem:[%s1219 + $0x4] sm:$0xf]
        %v1222 = vld [vmem:[%s1219 + $0x8] sm:$0xf]
        %v1223 = vld [vmem:[%s1219 + $0xc] sm:$0xf]
        %v1224 = vunpack.c.l.bf16 %v1220
        %v1225 = vunpack.c.l.bf16 %v1221
        %v1226 = vunpack.c.l.bf16 %v1222
        %v1227 = vunpack.c.l.bf16 %v1223
        %v1228 = vmax.f32 %v1205, -5.0
        %v1229 = vmax.f32 %v1208, -5.0
        %v1230 = vmax.f32 %v1213, -5.0
        %v1231 = vmax.f32 %v1216, -5.0
        %v1232 = vmin.f32 %v1228, 5.0
        %v1233 = vmin.f32 %v1229, 5.0
        %v1234 = vmin.f32 %v1230, 5.0
        %v1235 = vmin.f32 %v1231, 5.0
        %v1236 = vadd.f32 %v1232, %v1224
        %v1237 = vadd.f32 %v1233, %v1225
        %v1238 = vadd.f32 %v1234, %v1226
        %v1239 = vadd.f32 %v1235, %v1227
        %v1240 = vpack.c.bf16 %v1237, %v1236
        %v1241 = vpack.c.bf16 %v1239, %v1238
        %v1244 = vunpack.c.l.b16 %v1240
        %v1245 = vunpack.c.h.b16 %v1240
        %v1246 = vunpack.c.l.b16 %v1241
        %v1247 = vunpack.c.h.b16 %v1241
        %v1248 = vpack.c.b16 %v1244, %v1244
        %v1249 = vpack.c.b16 %v1245, %v1245
        %v1250 = vpack.c.b16 %v1246, %v1246
        %v1251 = vpack.c.b16 %v1247, %v1247
        %s1256 = scalar_lea.vmem %s582, 32
        %1257 = vst.msk [vmem:[%s1256] sm:$0xf] %vm723, %v1248
        %1258 = vst.msk [vmem:[%s1256 + $0x4] sm:$0xf] %vm723, %v1249
        %1259 = vst.msk [vmem:[%s1256 + $0x8] sm:$0xf] %vm723, %v1250
        %1260 = vst.msk [vmem:[%s1256 + $0xc] sm:$0xf] %vm723, %v1251
        %s1261 = scalar_lea.vmem %s465, 96 [#allocation2]
        %v1262 = vld [vmem:[%s1261] sm:$0xf]
        %v1263 = vld [vmem:[%s1261 + $0x4] sm:$0xf]
        %v1264 = vld [vmem:[%s1261 + $0x8] sm:$0xf]
        %v1265 = vld [vmem:[%s1261 + $0xc] sm:$0xf]
        %v1266 = vunpack.c.l.bf16 %v1262
        %v1267 = vunpack.c.l.bf16 %v1263
        %v1268 = vunpack.c.l.bf16 %v1264
        %v1269 = vunpack.c.l.bf16 %v1265
        %v1270 = vadd.f32 %v1236, %v601
        %v1271 = vadd.f32 %v1237, %v602
        %v1272 = vadd.f32 %v1238, %v603
        %v1273 = vadd.f32 %v1239, %v604
        %v1274 = vadd.f32 %v1266, %v601
        %v1275 = vadd.f32 %v1267, %v602
        %v1276 = vadd.f32 %v1268, %v603
        %v1277 = vadd.f32 %v1269, %v604
        %v1278 = vxor.u32 %v1274, 2147483648
        %v1279 = vxor.u32 %v1275, 2147483648
        %v1280 = vxor.u32 %v1276, 2147483648
        %v1281 = vxor.u32 %v1277, 2147483648
        %v1282 = vmul.f32 %v1278, 1.442695
        %v1283 = vpow.pop %v1282
        %v1284 = vmul.f32 %v1279, 1.442695
        %v1285 = vpow.pop %v1284
        %v1286 = vmul.f32 %v1280, 1.442695
        %v1287 = vpow.pop %v1286
        %v1288 = vmul.f32 %v1281, 1.442695
        %v1289 = vpow.pop %v1288
        %v1290 = vadd.f32 %v1283, 1.0
        %v1291 = vadd.f32 %v1285, 1.0
        %v1292 = vadd.f32 %v1287, 1.0
        %v1293 = vadd.f32 %v1289, 1.0
        %v1294 = vrcp.pop %v1290
        %v1295 = vmul.f32 1.0, %v1294
        %v1296 = vrcp.pop %v1291
        %v1297 = vmul.f32 1.0, %v1296
        %v1298 = vrcp.pop %v1292
        %v1299 = vmul.f32 1.0, %v1298
        %v1300 = vrcp.pop %v1293
        %v1301 = vmul.f32 1.0, %v1300
        %v1302 = vsel %vm769, %v1270, -inf
        %1303 = vmax.xlane.f32.xlu0 %v1302
        %v1304 = vpop.xlane.xlu0 %1303
        %v1305 = vsel %vm769, %v1271, -inf
        %1306 = vmax.xlane.f32.xlu0 %v1305
        %v1307 = vpop.xlane.xlu0 %1306
        %v1308 = vsel %vm769, %v1272, -inf
        %1309 = vmax.xlane.f32.xlu0 %v1308
        %v1310 = vpop.xlane.xlu0 %1309
        %v1311 = vsel %vm769, %v1273, -inf
        %1312 = vmax.xlane.f32.xlu0 %v1311
        %v1313 = vpop.xlane.xlu0 %1312
        %v1314 = vsub.f32 %v1270, %v1304
        %v1315 = vsub.f32 %v1271, %v1307
        %v1316 = vsub.f32 %v1272, %v1310
        %v1317 = vsub.f32 %v1273, %v1313
        %v1318 = vmul.f32 %v1314, 1.442695
        %v1319 = vpow.pop %v1318
        %v1320 = vmul.f32 %v1315, 1.442695
        %v1321 = vpow.pop %v1320
        %v1322 = vmul.f32 %v1316, 1.442695
        %v1323 = vpow.pop %v1322
        %v1324 = vmul.f32 %v1317, 1.442695
        %v1325 = vpow.pop %v1324
        %v1326 = vsel %vm769, %v1319, 0.0
        %1327 = vadd.xlane.f32.xlu0 %v1326
        %v1328 = vpop.xlane.xlu0 %1327
        %v1329 = vsel %vm769, %v1321, 0.0
        %1330 = vadd.xlane.f32.xlu0 %v1329
        %v1331 = vpop.xlane.xlu0 %1330
        %v1332 = vsel %vm769, %v1323, 0.0
        %1333 = vadd.xlane.f32.xlu0 %v1332
        %v1334 = vpop.xlane.xlu0 %1333
        %v1335 = vsel %vm769, %v1325, 0.0
        %1336 = vadd.xlane.f32.xlu0 %v1335
        %v1337 = vpop.xlane.xlu0 %1336
        %v1338 = vrcp.pop %v1328
        %v1339 = vrcp.pop %v1331
        %v1340 = vrcp.pop %v1334
        %v1341 = vrcp.pop %v1337
        %v1342 = vmul.f32 %v1319, %v1338
        %v1343 = vmul.f32 %v1321, %v1339
        %v1344 = vmul.f32 %v1323, %v1340
        %v1345 = vmul.f32 %v1325, %v1341
        %v1346 = vmul.f32 %v1342, %v1295
        %v1347 = vmul.f32 %v1343, %v1297
        %v1348 = vmul.f32 %v1344, %v1299
        %v1349 = vmul.f32 %v1345, %v1301
        %v1350 = vpack.c.bf16 %v1347, %v1346
        %v1351 = vpack.c.bf16 %v1349, %v1348
        %1352 = vrot.lane.b32.xlu0 %v828, 112
        %v1353 = vpop.permute.xlu0 %1352
        %1354 = vrot.lane.b32.xlu0 %v829, 112
        %v1355 = vpop.permute.xlu0 %1354
        %v1359 = vsel %vm769, %v1350, 0
        %v1362 = vsel %vm769, %v1351, 0
        %1364 = vmatprep.subr.bf16.mxu0 0
        %1365 = vmatpush1.bf16.msra.mxu0 0
        %1366 = vmatprep.subr.bf16.mxu0 0
        %1367 = vmatpush1.bf16.msra.mxu0 0
        %1368 = vmatprep.subr.bf16.mxu0 0
        %1369 = vmatpush1.bf16.msra.mxu0 0
        %1370 = vmatprep.subr.bf16.mxu0 0
        %1371 = vmatpush1.bf16.msra.mxu0 0
        %1372 = vmatprep.subr.bf16.mxu0 0
        %1373 = vmatpush1.bf16.msra.mxu0 0
        %1374 = vmatprep.subr.bf16.mxu0 0
        %1375 = vmatpush1.bf16.msra.mxu0 0
        %1376 = vmatprep.subr.bf16.mxu0 0
        %1377 = vmatpush1.bf16.msra.mxu0 %v1355
        %1378 = vmatprep.subr.bf16.mxu0 0
        %1379 = vmatpush1.bf16.msra.mxu0 %v1353
        %1380 = vmatprep.subr.bf16.mxu0 0
        %1381 = vmatpush2.bf16.msra.mxu0 0
        %1382 = vmatprep.subr.bf16.mxu0 0
        %1383 = vmatpush2.bf16.msra.mxu0 0
        %1384 = vmatprep.subr.bf16.mxu0 0
        %1385 = vmatpush2.bf16.msra.mxu0 0
        %1386 = vmatprep.subr.bf16.mxu0 0
        %1387 = vmatpush2.bf16.msra.mxu0 0
        %1388 = vmatprep.subr.bf16.mxu0 0
        %1389 = vmatpush2.bf16.msra.mxu0 0
        %1390 = vmatprep.subr.bf16.mxu0 0
        %1391 = vmatpush2.bf16.msra.mxu0 0
        %1392 = vmatprep.subr.bf16.mxu0 0
        %1393 = vmatpush2.bf16.msra.mxu0 0
        %1394 = vmatprep.subr.bf16.mxu0 0
        %1395 = vmatpush2.bf16.msra.mxu0 0
        %1396 = vmatprep.mubr.bf16.mxu0 0
        %1397 = vmatmul.mubr.bf16.gmra.mxu0 %v1359
        %v1398 = vpop.f32.mrf.mxu0
        %v1399 = vadd.f32 0.0, %v1398
        %v1400 = vpop.f32.mrf.mxu0
        %v1401 = vpop.f32.mrf.mxu0
        %v1402 = vadd.f32 0.0, %v1401
        %v1403 = vpop.f32.mrf.mxu0
        %1404 = vmatprep.mubr.bf16.mxu0 0
        %1405 = vmatmul.mubr.bf16.gmra.mxu0 %v1362
        %v1406 = vpop.f32.mrf.mxu0
        %v1407 = vadd.f32 0.0, %v1406
        %v1408 = vpop.f32.mrf.mxu0
        %v1409 = vpop.f32.mrf.mxu0
        %v1410 = vadd.f32 0.0, %v1409
        %v1411 = vpop.f32.mrf.mxu0
        %1412 = vdwg.mxu0
        %1413 = vrot.lane.b32.xlu0 %v613, 104
        %v1414 = vpop.permute.xlu0 %1413
        %1415 = vrot.lane.b32.xlu0 %v614, 104
        %v1416 = vpop.permute.xlu0 %1415
        %1417 = vrot.lane.b32.xlu0 %v623, 104
        %v1418 = vpop.permute.xlu0 %1417
        %1419 = vrot.lane.b32.xlu0 %v624, 104
        %v1420 = vpop.permute.xlu0 %1419
        %v1422 = vsel %vm625, %v1414, 0
        %v1425 = vsel %vm625, %v1416, 0
        %v1428 = vsel %vm625, %v1418, 0
        %v1431 = vsel %vm625, %v1420, 0
        %1433 = vmatprep.subr.bf16.mxu0 0
        %1434 = vmatpush1.bf16.xpose.msra.mxu0 0
        %1435 = vmatprep.subr.bf16.mxu0 0
        %1436 = vmatpush1.bf16.xpose.msra.mxu0 0
        %1437 = vmatprep.subr.bf16.mxu0 0
        %1438 = vmatpush1.bf16.xpose.msra.mxu0 0
        %1439 = vmatprep.subr.bf16.mxu0 0
        %1440 = vmatpush1.bf16.xpose.msra.mxu0 0
        %1441 = vmatprep.subr.bf16.mxu0 0
        %1442 = vmatpush1.bf16.xpose.msra.mxu0 0
        %1443 = vmatprep.subr.bf16.mxu0 0
        %1444 = vmatpush1.bf16.xpose.msra.mxu0 0
        %1445 = vmatprep.subr.bf16.mxu0 0
        %1446 = vmatpush1.bf16.xpose.msra.mxu0 %v1431
        %1447 = vmatprep.subr.bf16.mxu0 0
        %1448 = vmatpush1.bf16.xpose.msra.mxu0 %v1428
        %1449 = vmatprep.subr.bf16.mxu0 0
        %1450 = vmatpush2.bf16.xpose.msra.mxu0 0
        %1451 = vmatprep.subr.bf16.mxu0 0
        %1452 = vmatpush2.bf16.xpose.msra.mxu0 0
        %1453 = vmatprep.subr.bf16.mxu0 0
        %1454 = vmatpush2.bf16.xpose.msra.mxu0 0
        %1455 = vmatprep.subr.bf16.mxu0 0
        %1456 = vmatpush2.bf16.xpose.msra.mxu0 0
        %1457 = vmatprep.subr.bf16.mxu0 0
        %1458 = vmatpush2.bf16.xpose.msra.mxu0 0
        %1459 = vmatprep.subr.bf16.mxu0 0
        %1460 = vmatpush2.bf16.xpose.msra.mxu0 0
        %1461 = vmatprep.subr.bf16.mxu0 0
        %1462 = vmatpush2.bf16.xpose.msra.mxu0 0
        %1463 = vmatprep.subr.bf16.mxu0 0
        %1464 = vmatpush2.bf16.xpose.msra.mxu0 0
        %1465 = vmatprep.mubr.bf16.mxu0 0
        %1466 = vmatmul.mubr.bf16.gmra.mxu0 %v1422
        %v1467 = vpop.f32.mrf.mxu0
        %v1468 = vadd.f32 0.0, %v1467
        %v1469 = vpop.f32.mrf.mxu0
        %v1470 = vpop.f32.mrf.mxu0
        %v1471 = vadd.f32 0.0, %v1470
        %v1472 = vpop.f32.mrf.mxu0
        %1473 = vmatprep.mubr.bf16.mxu0 0
        %1474 = vmatmul.mubr.bf16.gmra.mxu0 %v1425
        %v1475 = vpop.f32.mrf.mxu0
        %v1476 = vadd.f32 0.0, %v1475
        %v1477 = vpop.f32.mrf.mxu0
        %v1478 = vpop.f32.mrf.mxu0
        %v1479 = vadd.f32 0.0, %v1478
        %v1480 = vpop.f32.mrf.mxu0
        %1481 = vdwg.mxu0
        %s1482 = scalar_lea.vmem %s465, 48 [#allocation2]
        %v1483 = vld [vmem:[%s1482] sm:$0xf]
        %v1484 = vld [vmem:[%s1482 + $0x4] sm:$0xf]
        %v1485 = vld [vmem:[%s1482 + $0x8] sm:$0xf]
        %v1486 = vld [vmem:[%s1482 + $0xc] sm:$0xf]
        %v1487 = vunpack.c.l.bf16 %v1483
        %v1488 = vunpack.c.l.bf16 %v1484
        %v1489 = vunpack.c.l.bf16 %v1485
        %v1490 = vunpack.c.l.bf16 %v1486
        %v1491 = vmax.f32 %v1468, -5.0
        %v1492 = vmax.f32 %v1471, -5.0
        %v1493 = vmax.f32 %v1476, -5.0
        %v1494 = vmax.f32 %v1479, -5.0
        %v1495 = vmin.f32 %v1491, 5.0
        %v1496 = vmin.f32 %v1492, 5.0
        %v1497 = vmin.f32 %v1493, 5.0
        %v1498 = vmin.f32 %v1494, 5.0
        %v1499 = vadd.f32 %v1495, %v1487
        %v1500 = vadd.f32 %v1496, %v1488
        %v1501 = vadd.f32 %v1497, %v1489
        %v1502 = vadd.f32 %v1498, %v1490
        %v1503 = vpack.c.bf16 %v1500, %v1499
        %v1504 = vpack.c.bf16 %v1502, %v1501
        %v1507 = vunpack.c.l.b16 %v1503
        %v1508 = vunpack.c.h.b16 %v1503
        %v1509 = vunpack.c.l.b16 %v1504
        %v1510 = vunpack.c.h.b16 %v1504
        %v1511 = vpack.c.b16 %v1507, %v1507
        %v1512 = vpack.c.b16 %v1508, %v1508
        %v1513 = vpack.c.b16 %v1509, %v1509
        %v1514 = vpack.c.b16 %v1510, %v1510
        %s1519 = scalar_lea.vmem %s582, 48
        %1520 = vst.msk [vmem:[%s1519] sm:$0xf] %vm723, %v1511
        %1521 = vst.msk [vmem:[%s1519 + $0x4] sm:$0xf] %vm723, %v1512
        %1522 = vst.msk [vmem:[%s1519 + $0x8] sm:$0xf] %vm723, %v1513
        %1523 = vst.msk [vmem:[%s1519 + $0xc] sm:$0xf] %vm723, %v1514
        %s1524 = scalar_lea.vmem %s465, 112 [#allocation2]
        %v1525 = vld [vmem:[%s1524] sm:$0xf]
        %v1526 = vld [vmem:[%s1524 + $0x4] sm:$0xf]
        %v1527 = vld [vmem:[%s1524 + $0x8] sm:$0xf]
        %v1528 = vld [vmem:[%s1524 + $0xc] sm:$0xf]
        %v1529 = vunpack.c.l.bf16 %v1525
        %v1530 = vunpack.c.l.bf16 %v1526
        %v1531 = vunpack.c.l.bf16 %v1527
        %v1532 = vunpack.c.l.bf16 %v1528
        %v1533 = vadd.f32 %v1499, %v601
        %v1534 = vadd.f32 %v1500, %v602
        %v1535 = vadd.f32 %v1501, %v603
        %v1536 = vadd.f32 %v1502, %v604
        %v1537 = vadd.f32 %v1529, %v601
        %v1538 = vadd.f32 %v1530, %v602
        %v1539 = vadd.f32 %v1531, %v603
        %v1540 = vadd.f32 %v1532, %v604
        %v1541 = vxor.u32 %v1537, 2147483648
        %v1542 = vxor.u32 %v1538, 2147483648
        %v1543 = vxor.u32 %v1539, 2147483648
        %v1544 = vxor.u32 %v1540, 2147483648
        %v1545 = vmul.f32 %v1541, 1.442695
        %v1546 = vpow.pop %v1545
        %v1547 = vmul.f32 %v1542, 1.442695
        %v1548 = vpow.pop %v1547
        %v1549 = vmul.f32 %v1543, 1.442695
        %v1550 = vpow.pop %v1549
        %v1551 = vmul.f32 %v1544, 1.442695
        %v1552 = vpow.pop %v1551
        %v1553 = vadd.f32 %v1546, 1.0
        %v1554 = vadd.f32 %v1548, 1.0
        %v1555 = vadd.f32 %v1550, 1.0
        %v1556 = vadd.f32 %v1552, 1.0
        %v1557 = vrcp.pop %v1553
        %v1558 = vmul.f32 1.0, %v1557
        %v1559 = vrcp.pop %v1554
        %v1560 = vmul.f32 1.0, %v1559
        %v1561 = vrcp.pop %v1555
        %v1562 = vmul.f32 1.0, %v1561
        %v1563 = vrcp.pop %v1556
        %v1564 = vmul.f32 1.0, %v1563
        %v1565 = vsel %vm769, %v1533, -inf
        %1566 = vmax.xlane.f32.xlu0 %v1565
        %v1567 = vpop.xlane.xlu0 %1566
        %v1568 = vsel %vm769, %v1534, -inf
        %1569 = vmax.xlane.f32.xlu0 %v1568
        %v1570 = vpop.xlane.xlu0 %1569
        %v1571 = vsel %vm769, %v1535, -inf
        %1572 = vmax.xlane.f32.xlu0 %v1571
        %v1573 = vpop.xlane.xlu0 %1572
        %v1574 = vsel %vm769, %v1536, -inf
        %1575 = vmax.xlane.f32.xlu0 %v1574
        %v1576 = vpop.xlane.xlu0 %1575
        %v1577 = vsub.f32 %v1533, %v1567
        %v1578 = vsub.f32 %v1534, %v1570
        %v1579 = vsub.f32 %v1535, %v1573
        %v1580 = vsub.f32 %v1536, %v1576
        %v1581 = vmul.f32 %v1577, 1.442695
        %v1582 = vpow.pop %v1581
        %v1583 = vmul.f32 %v1578, 1.442695
        %v1584 = vpow.pop %v1583
        %v1585 = vmul.f32 %v1579, 1.442695
        %v1586 = vpow.pop %v1585
        %v1587 = vmul.f32 %v1580, 1.442695
        %v1588 = vpow.pop %v1587
        %v1589 = vsel %vm769, %v1582, 0.0
        %1590 = vadd.xlane.f32.xlu0 %v1589
        %v1591 = vpop.xlane.xlu0 %1590
        %v1592 = vsel %vm769, %v1584, 0.0
        %1593 = vadd.xlane.f32.xlu0 %v1592
        %v1594 = vpop.xlane.xlu0 %1593
        %v1595 = vsel %vm769, %v1586, 0.0
        %1596 = vadd.xlane.f32.xlu0 %v1595
        %v1597 = vpop.xlane.xlu0 %1596
        %v1598 = vsel %vm769, %v1588, 0.0
        %1599 = vadd.xlane.f32.xlu0 %v1598
        %v1600 = vpop.xlane.xlu0 %1599
        %v1601 = vrcp.pop %v1591
        %v1602 = vrcp.pop %v1594
        %v1603 = vrcp.pop %v1597
        %v1604 = vrcp.pop %v1600
        %v1605 = vmul.f32 %v1582, %v1601
        %v1606 = vmul.f32 %v1584, %v1602
        %v1607 = vmul.f32 %v1586, %v1603
        %v1608 = vmul.f32 %v1588, %v1604
        %v1609 = vmul.f32 %v1605, %v1558
        %v1610 = vmul.f32 %v1606, %v1560
        %v1611 = vmul.f32 %v1607, %v1562
        %v1612 = vmul.f32 %v1608, %v1564
        %v1613 = vpack.c.bf16 %v1610, %v1609
        %v1614 = vpack.c.bf16 %v1612, %v1611
        %1615 = vrot.lane.b32.xlu0 %v828, 104
        %v1616 = vpop.permute.xlu0 %1615
        %1617 = vrot.lane.b32.xlu0 %v829, 104
        %v1618 = vpop.permute.xlu0 %1617
        %v1622 = vsel %vm769, %v1613, 0
        %v1625 = vsel %vm769, %v1614, 0
        %1627 = vmatprep.subr.bf16.mxu0 0
        %1628 = vmatpush1.bf16.msra.mxu0 0
        %1629 = vmatprep.subr.bf16.mxu0 0
        %1630 = vmatpush1.bf16.msra.mxu0 0
        %1631 = vmatprep.subr.bf16.mxu0 0
        %1632 = vmatpush1.bf16.msra.mxu0 0
        %1633 = vmatprep.subr.bf16.mxu0 0
        %1634 = vmatpush1.bf16.msra.mxu0 0
        %1635 = vmatprep.subr.bf16.mxu0 0
        %1636 = vmatpush1.bf16.msra.mxu0 0
        %1637 = vmatprep.subr.bf16.mxu0 0
        %1638 = vmatpush1.bf16.msra.mxu0 0
        %1639 = vmatprep.subr.bf16.mxu0 0
        %1640 = vmatpush1.bf16.msra.mxu0 %v1618
        %1641 = vmatprep.subr.bf16.mxu0 0
        %1642 = vmatpush1.bf16.msra.mxu0 %v1616
        %1643 = vmatprep.subr.bf16.mxu0 0
        %1644 = vmatpush2.bf16.msra.mxu0 0
        %1645 = vmatprep.subr.bf16.mxu0 0
        %1646 = vmatpush2.bf16.msra.mxu0 0
        %1647 = vmatprep.subr.bf16.mxu0 0
        %1648 = vmatpush2.bf16.msra.mxu0 0
        %1649 = vmatprep.subr.bf16.mxu0 0
        %1650 = vmatpush2.bf16.msra.mxu0 0
        %1651 = vmatprep.subr.bf16.mxu0 0
        %1652 = vmatpush2.bf16.msra.mxu0 0
        %1653 = vmatprep.subr.bf16.mxu0 0
        %1654 = vmatpush2.bf16.msra.mxu0 0
        %1655 = vmatprep.subr.bf16.mxu0 0
        %1656 = vmatpush2.bf16.msra.mxu0 0
        %1657 = vmatprep.subr.bf16.mxu0 0
        %1658 = vmatpush2.bf16.msra.mxu0 0
        %1659 = vmatprep.mubr.bf16.mxu0 0
        %1660 = vmatmul.mubr.bf16.gmra.mxu0 %v1622
        %v1661 = vpop.f32.mrf.mxu0
        %v1662 = vadd.f32 0.0, %v1661
        %v1663 = vpop.f32.mrf.mxu0
        %v1664 = vpop.f32.mrf.mxu0
        %v1665 = vadd.f32 0.0, %v1664
        %v1666 = vpop.f32.mrf.mxu0
        %1667 = vmatprep.mubr.bf16.mxu0 0
        %1668 = vmatmul.mubr.bf16.gmra.mxu0 %v1625
        %v1669 = vpop.f32.mrf.mxu0
        %v1670 = vadd.f32 0.0, %v1669
        %v1671 = vpop.f32.mrf.mxu0
        %v1672 = vpop.f32.mrf.mxu0
        %v1673 = vadd.f32 0.0, %v1672
        %v1674 = vpop.f32.mrf.mxu0
        %1675 = vdwg.mxu0
        %1680 = vrot.lane.b32.xlu0 %v1136, 8
        %v1681 = vpop.permute.xlu0 %1680
        %1682 = vrot.lane.b32.xlu0 %v1139, 8
        %v1683 = vpop.permute.xlu0 %1682
        %1684 = vrot.lane.b32.xlu0 %v1144, 8
        %v1685 = vpop.permute.xlu0 %1684
        %1686 = vrot.lane.b32.xlu0 %v1147, 8
        %v1687 = vpop.permute.xlu0 %1686
        %1696 = vrot.lane.b32.xlu0 %v1399, 16
        %v1697 = vpop.permute.xlu0 %1696
        %1698 = vrot.lane.b32.xlu0 %v1402, 16
        %v1699 = vpop.permute.xlu0 %1698
        %1700 = vrot.lane.b32.xlu0 %v1407, 16
        %v1701 = vpop.permute.xlu0 %1700
        %1702 = vrot.lane.b32.xlu0 %v1410, 16
        %v1703 = vpop.permute.xlu0 %1702
        %1712 = vrot.lane.b32.xlu0 %v1662, 24
        %v1713 = vpop.permute.xlu0 %1712
        %1714 = vrot.lane.b32.xlu0 %v1665, 24
        %v1715 = vpop.permute.xlu0 %1714
        %1716 = vrot.lane.b32.xlu0 %v1670, 24
        %v1717 = vpop.permute.xlu0 %1716
        %1718 = vrot.lane.b32.xlu0 %v1673, 24
        %v1719 = vpop.permute.xlu0 %1718
        %v1724 = vsel %vm625, %v873, %v1681
        %v1725 = vsel %vm625, %v876, %v1683
        %v1726 = vsel %vm625, %v881, %v1685
        %v1727 = vsel %vm625, %v884, %v1687
        %vm1728 = vcmask 130048
        %v1729 = vsel %vm1728, %v1724, %v1697
        %v1730 = vsel %vm1728, %v1725, %v1699
        %v1731 = vsel %vm1728, %v1726, %v1701
        %v1732 = vsel %vm1728, %v1727, %v1703
        %vm1733 = vcmask 195584
        %v1734 = vsel %vm1733, %v1729, %v1713
        %v1735 = vsel %vm1733, %v1730, %v1715
        %v1736 = vsel %vm1733, %v1731, %v1717
        %v1737 = vsel %vm1733, %v1732, %v1719
        %1738 = vst.msk [vmem:[%s572] sm:$0xff] %vm769, %v1734
        %1739 = vst.msk [vmem:[%s572 + $0x8] sm:$0xff] %vm769, %v1735
        %1740 = vst.msk [vmem:[%s572 + $0x10] sm:$0xff] %vm769, %v1736
        %1741 = vst.msk [vmem:[%s572 + $0x18] sm:$0xff] %vm769, %v1737
        %s1742 = smul.u32 4, %s23
        %p1743 = scmp.lt.s32.totalorder %s22, 1
        %s1744 = scalar_select %p1743, %s22, 1
        %p1745 = scmp.lt.s32.totalorder %s1742, 3
        %s1746 = scalar_select %p1745, %s1742, 3
        %s1747 = smul.addr %s1744, 4
        %s1748 = sadd.s32 %s1746, %s1747
        %s1749 = smul.addr %s1748, 8
        %s1750 = scalar_lea.vmem %s5, %s1749
        %s1751 = smul.u32 4, %s23
        %p1752 = scmp.lt.s32.totalorder %s22, 1
        %s1753 = scalar_select %p1752, %s22, 1
        %p1754 = scmp.lt.s32.totalorder %s1751, 3
        %s1755 = scalar_select %p1754, %s1751, 3
        %s1756 = smul.addr %s1753, 16
        %s1757 = sadd.s32 %s1755, %s1756
        %s1758 = smul.addr %s1757, 4
        %s1759 = scalar_lea.vmem %s6, %s1758
        // Predicated region
        $region82: #{egt_layer_forward.1} parent=76 // pred_check
          %p1760 = pneg %p186
        $region83: #{egt_layer_forward.1} parent=76 // pred_check_branch
          %1762 = sbr.rel (%p1760) target = $region85
        $region84: #{egt_layer_forward.1} parent=76 // pred_region
          %s1763 = smul.u32 4, %s23
        $region85: #{egt_layer_forward.1} parent=76 // pred_fallthru
          _
        // Predicated region
        $region86: #{egt_layer_forward.1} parent=76 // pred_check
          %p1764 = pneg %p214
        $region87: #{egt_layer_forward.1} parent=76 // pred_check_branch
          %1766 = sbr.rel (%p1764) target = $region89
        $region88: #{egt_layer_forward.1} parent=76 // pred_region
          %s1767 = smul.u32 4, %s23
        $region89: #{egt_layer_forward.1} parent=76 // pred_fallthru
          _
      $region77: #{egt_layer_forward.1} parent=5 // pred_fallthru
        _
      %p1768 = scmp.le.s32.totalorder 2, %s13
      // Predicated region
      $region90: #{egt_layer_forward.1} parent=5 // pred_check
        %p1769 = pneg %p1768
      $region91: #{egt_layer_forward.1} parent=5 // pred_check_branch
        %1771 = sbr.rel (%p1769) target = $region93
      $region92: #{egt_layer_forward.1} parent=5 // pred_region
        %s1772 = ssub.s32 %s13, 2
        // Predicated region
        $region94: #{egt_layer_forward.1} parent=92 // pred_check
          %p1773 = pneg %p192
        $region95: #{egt_layer_forward.1} parent=92 // pred_check_branch
          %1775 = sbr.rel (%p1773) target = $region97
        $region96: #{egt_layer_forward.1} parent=92 // pred_region
          %s1776 = smul.u32 4, %s25
          %p1777 = scmp.lt.s32.totalorder %s24, 1
          %s1778 = scalar_select %p1777, %s24, 1
          %p1779 = scmp.lt.s32.totalorder %s1776, 3
          %s1780 = scalar_select %p1779, %s1776, 3
          %s1781 = smul.addr %s1778, 4
          %s1782 = sadd.s32 %s1780, %s1781
          %s1783 = smul.addr %s1782, 8
          %s1784 = scalar_lea.vmem %s5, %s1783
        $region97: #{egt_layer_forward.1} parent=92 // pred_fallthru
          _
        // Predicated region
        $region98: #{egt_layer_forward.1} parent=92 // pred_check
          %p1785 = pneg %p220
        $region99: #{egt_layer_forward.1} parent=92 // pred_check_branch
          %1787 = sbr.rel (%p1785) target = $region101
        $region100: #{egt_layer_forward.1} parent=92 // pred_region
          %s1788 = smul.u32 4, %s25
          %p1789 = scmp.lt.s32.totalorder %s24, 1
          %s1790 = scalar_select %p1789, %s24, 1
          %p1791 = scmp.lt.s32.totalorder %s1788, 3
          %s1792 = scalar_select %p1791, %s1788, 3
          %s1793 = smul.addr %s1790, 16
          %s1794 = sadd.s32 %s1792, %s1793
          %s1795 = smul.addr %s1794, 4
          %s1796 = scalar_lea.vmem %s6, %s1795
        $region101: #{egt_layer_forward.1} parent=92 // pred_fallthru
          _
      $region93: #{egt_layer_forward.1} parent=5 // pred_fallthru
        _
    $region6: #{egt_layer_forward.1} parent=1 // loop_footer
      %s17 = sadd.s32 1, %s13
    $region7: #{egt_layer_forward.1} parent=1 // loop_footer_branch
      %12 = sbr.rel target = $region3
    $region8: #{egt_layer_forward.1} parent=1 // loop_exit
      _

</llo_original>
